<compile_context>
chip_gen: v7x
topology: tpu7x:2x2x1
jax: 0.10.0
libtpu: 0.0.40
codegen_flags: <defaults>
</compile_context>

<pallas_src>
import functools

import jax
import jax.numpy as jnp
from jax.experimental import pallas as pl
from jax.experimental.pallas import tpu as pltpu


def _round_up(x, m):
    return ((x + m - 1) // m) * m


def _fpn_t_kernel(feat_ref, w_ref, b_ref, dif_ref, sum_ref, acc_ref, *, t, c):
    """One (batch-tile, hw-tile) grid step.

    feat_ref: (TB, T*C, THW)  feature tile, native dtype
    w_ref   : (T, C, K)       f32 classifier weights, pre-scaled by 1/(h*w)
    b_ref   : (T, K)          f32 classifier biases
    dif_ref : (TB, T)         f32 output (written on last HW step)
    sum_ref : (TB, K)         f32 output (written on last HW step)
    acc_ref : (TB, T*C, 128)  f32 lane-resident spatial-sum accumulator
    """
    k = pl.program_id(1)

    @pl.when(k == 0)
    def _init():
        acc_ref[...] = jnp.zeros_like(acc_ref)

    # ---- Hot loop: lane-resident spatial accumulation ----------------------
    # Add each aligned 128-lane chunk of the HW tile into the accumulator:
    # pure VPU adds (no XLU in the hot loop), with the f32 cast fused into the
    # accumulation so no full-tile f32 temporary is materialized.
    n_chunks = feat_ref.shape[-1] // 128

    def _accum(j, carry):
        off = pl.multiple_of(j * 128, 128)
        acc_ref[...] += feat_ref[:, :, pl.ds(off, 128)].astype(jnp.float32)
        return carry

    jax.lax.fori_loop(0, n_chunks, _accum, 0, unroll=(n_chunks <= 8))

    # ---- Finalize: classifier + softmaxes (once per batch tile) ------------
    @pl.when(k == pl.num_programs(1) - 1)
    def _finalize():
        pooled = jnp.sum(acc_ref[...], axis=-1)        # (TB, T*C); one XLU reduce
        w_all = w_ref[...]                              # (T, C, K), 1/HW pre-folded
        bias_all = b_ref[...]                           # (T, K)

        # Per-time-step classifier as canonical MXU matmuls (static unroll).
        logits_t = []
        for i in range(t):
            p_i = pooled[:, i * c:(i + 1) * c]          # (TB, C)
            logits_t.append(
                jnp.dot(p_i, w_all[i], preferred_element_type=jnp.float32)
                + bias_all[i:i + 1, :])                 # (TB, K)

        # out_sfpn_t = sum over time steps (pre-softmax logits).
        out_sum = logits_t[0]
        for x in logits_t[1:]:
            out_sum = out_sum + x
        sum_ref[...] = out_sum

        # Per-t softmax over classes (exact), then |p - p[:, 0]| summed over k.
        dif_t = []
        for lg in logits_t:
            m = jnp.max(lg, axis=-1, keepdims=True)
            e = jnp.exp(lg - m)
            p = e / jnp.sum(e, axis=-1, keepdims=True)
            dif_t.append(jnp.sum(jnp.abs(p - p[:, 0:1]), axis=-1, keepdims=True))

        # Softmax over the time axis (exact reciprocal; finalize-only).
        m2 = dif_t[0]
        for x in dif_t[1:]:
            m2 = jnp.maximum(m2, x)
        e_t = [jnp.exp(d - m2) for d in dif_t]
        denom = e_t[0]
        for x in e_t[1:]:
            denom = denom + x
        inv = 1.0 / denom
        dif_ref[...] = jnp.concatenate([e * inv for e in e_t], axis=-1)  # (TB, T)


def _vmem_budget():
    """Per-chip (vmem_limit cap, max feature-tile bytes)."""
    cap = 64 << 20  # conservative default = v7x physical VMEM
    try:
        cap = int(pltpu.get_tpu_info().vmem_capacity_bytes)
    except Exception:
        pass
    if cap >= (96 << 20):
        # v5e / v6e: 128 MiB physical VMEM (scoped default is only 16/32 MiB).
        return 96 << 20, 24 << 20
    # v7x: 64 MiB physical -> leave headroom for Mosaic-internal scratch.
    return 48 << 20, 14 << 20


def _pick_batch_tile(b):
    # Prefer >=2 batch tiles so the "parallel" grid axis can shard across both
    # v7x TensorCores, while keeping output blocks sublane-legal (block sublane
    # dim must be a multiple of 8 or equal to the full extent).
    for tb in (8, 16, 32, 64):
        if b % tb == 0 and b // tb >= 2:
            return tb
    return b


def _pick_hw_tile(hw_pad, row_bytes, max_tile_bytes):
    """Largest multiple of 128 that divides hw_pad and fits the byte budget."""
    n = hw_pad // 128
    for m in range(n, 0, -1):
        if n % m == 0 and m * row_bytes <= max_tile_bytes:
            return m * 128
    return 128


def fpn_t_forward(feature_nchw, weights, biases, b, t, hw_tile=None):
    """feature_nchw: (b*t, c, h, w); weights: (t, class_num, c); biases: (t, class_num)."""
    b_t, c, h, w = feature_nchw.shape
    assert b_t == b * t
    class_num = weights.shape[1]
    hw = h * w
    hw_pad = _round_up(hw, 128)
    tc = t * c

    # Free view: (b*t, c, h, w) -> (b, t*c, h*w).
    feat = feature_nchw.reshape(b, tc, hw)
    if hw_pad != hw:
        # Zero-pad the spatial axis to a lane multiple; zeros don't change the
        # spatial sum and 1/(h*w) below uses the true hw.
        feat = jnp.pad(feat, ((0, 0), (0, 0), (0, hw_pad - hw)))
    itemsize = jnp.dtype(feat.dtype).itemsize

    # Fold AdaptiveAvgPool2d's 1/(h*w) into the weights; lay out (t, c, class_num)
    # so the finalize contraction is a canonical (TB,C)@(C,K) matmul.
    w_scaled = jnp.transpose(weights, (0, 2, 1)).astype(jnp.float32) * (1.0 / float(hw))
    bias_f32 = biases.astype(jnp.float32)

    tb = _pick_batch_tile(b)

    # Spatial (lane) tile: largest multiple of 128 dividing hw_pad within budget.
    vmem_cap, max_tile_bytes = _vmem_budget()
    sub_pack = {4: 8, 2: 16, 1: 32}.get(itemsize, 8)
    tc_pad_vmem = _round_up(tc, sub_pack)
    row_bytes = tb * tc_pad_vmem * 128 * itemsize        # one 128-lane chunk in VMEM
    if hw_tile is None:
        hw_tile = _pick_hw_tile(hw_pad, row_bytes, max_tile_bytes)
    assert hw_pad % hw_tile == 0 and hw_tile % 128 == 0

    grid = (b // tb, hw_pad // hw_tile)

    # VMEM accounting: 2x double-buffered feature tile + params/outputs (x2) +
    # accumulator + margin, capped below physical VMEM for this chip.
    feat_tile_bytes = row_bytes * (hw_tile // 128)
    acc_bytes = tb * _round_up(tc, 8) * 128 * 4
    param_bytes = t * (c + 1) * class_num * 4
    out_bytes = tb * (t + class_num) * 4
    fixed_bytes = acc_bytes + 2 * (param_bytes + out_bytes) + (2 << 20)
    vmem_limit = int(max(4 << 20, min(vmem_cap, 2 * feat_tile_bytes + fixed_bytes)))

    # Advisory cost hint: this kernel is HBM-bandwidth bound.
    cost = pl.CostEstimate(
        flops=int(2 * b * tc * hw_pad + 2 * b * t * c * class_num),
        transcendentals=int(b * t * (class_num + 1)),
        bytes_accessed=int(feat.size * itemsize + w_scaled.size * 4
                           + bias_f32.size * 4 + b * (t + class_num) * 4),
    )

    kernel = functools.partial(_fpn_t_kernel, t=t, c=c)

    dif, out_sum = pl.pallas_call(
        kernel,
        out_shape=(
            jax.ShapeDtypeStruct((b, t), jnp.float32),
            jax.ShapeDtypeStruct((b, class_num), jnp.float32),
        ),
        grid_spec=pltpu.PrefetchScalarGridSpec(
            num_scalar_prefetch=0,
            grid=grid,
            in_specs=[
                pl.BlockSpec((tb, tc, hw_tile), lambda i, k: (i, 0, k)),
                pl.BlockSpec((t, c, class_num), lambda i, k: (0, 0, 0)),
                pl.BlockSpec((t, class_num), lambda i, k: (0, 0)),
            ],
            out_specs=[
                pl.BlockSpec((tb, t), lambda i, k: (i, 0)),
                pl.BlockSpec((tb, class_num), lambda i, k: (i, 0)),
            ],
            scratch_shapes=[pltpu.VMEM((tb, tc, 128), jnp.float32)],
        ),
        compiler_params=pltpu.CompilerParams(
            dimension_semantics=("parallel", "arbitrary"),
            vmem_limit_bytes=vmem_limit,
        ),
        cost_estimate=cost,
    )(feat, w_scaled, bias_f32)

    # matches torch: dif.reshape(b_t, 1, 1, 1)
    return dif.reshape(b_t, 1, 1, 1), out_sum


def fpn_t_reference(feature_nchw, weights, biases, b, t):
    """Pure-JAX reference mirroring the PyTorch forward."""
    b_t, c, h, w = feature_nchw.shape
    feat = feature_nchw.reshape(b, t, c, h, w).astype(jnp.float32)
    pooled = jnp.mean(feat, axis=(-2, -1))                            # (b, t, c)
    logits = jnp.einsum("btc,tkc->btk", pooled,
                        weights.astype(jnp.float32)) + biases[None].astype(jnp.float32)
    out_sum = jnp.sum(logits, axis=1)
    probs = jax.nn.softmax(logits, axis=-1)
    dif = jnp.sum(jnp.abs(probs - probs[:, :, 0:1]), axis=-1)
    dif = jax.nn.softmax(dif, axis=-1)
    return dif.reshape(b_t, 1, 1, 1), out_sum


if __name__ == "__main__":
    def run_and_check(b, t, c, h, w, class_num, hw_tile):
        key = jax.random.PRNGKey(0)
        k_feat, k_w, k_b = jax.random.split(key, 3)
        feature = jax.random.normal(k_feat, (b * t, c, h, w), dtype=jnp.float32)
        weights = jax.random.normal(k_w, (t, class_num, c), dtype=jnp.float32) * 0.1
        biases = jax.random.normal(k_b, (t, class_num), dtype=jnp.float32) * 0.1

        dif, out_sfpn_t = fpn_t_forward(feature, weights, biases, b, t, hw_tile=hw_tile)
        jax.block_until_ready((dif, out_sfpn_t))

        dif_ref, out_ref = fpn_t_reference(feature, weights, biases, b, t)
        assert dif.shape == (b * t, 1, 1, 1)
        assert out_sfpn_t.shape == (b, class_num)
        assert jnp.allclose(out_sfpn_t, out_ref, atol=1e-4, rtol=1e-4)
        assert jnp.allclose(dif, dif_ref, atol=1e-4, rtol=1e-4)

    # Multi-step grid: 2 batch tiles of 8 (v7x megacore-shardable) x 2 HW tiles.
    run_and_check(b=16, t=4, c=8, h=16, w=16, class_num=2, hw_tile=128)
    # Degenerate single-step grid with automatic (largest-fitting) tile selection.
    run_and_check(b=2, t=4, c=8, h=16, w=16, class_num=2, hw_tile=None)
    # Spatial size not a multiple of 128 (14x14 -> zero-padded), odd class_num.
    run_and_check(b=4, t=4, c=4, h=14, w=14, class_num=3, hw_tile=None)

    print("KERNEL_OK")
</pallas_src>

<mosaic_0001>
module attributes {stable_mosaic.version = 11 : i64} {
  func.func @_fpn_t_kernel(%arg0: i32, %arg1: i32, %arg2: memref<8x32x128xf32, #tpu.memory_space<vmem>>, %arg3: memref<4x8x2xf32, #tpu.memory_space<vmem>>, %arg4: memref<4x2xf32, #tpu.memory_space<vmem>>, %arg5: memref<8x4xf32, #tpu.memory_space<vmem>>, %arg6: memref<8x2xf32, #tpu.memory_space<vmem>>, %arg7: memref<8x32x128xf32, #tpu.memory_space<vmem>>) attributes {dimension_semantics = [#tpu.dimension_semantics<parallel>, #tpu.dimension_semantics<arbitrary>], iteration_bounds = array<i64: 2, 2>, scalar_prefetch = 0 : i64, scratch_operands = 1 : i64, tpu.core_type = #tpu.core_type<tc>, window_params = [{transform_indices = @transform_0, window_bounds = array<i64: 8, 32, 128>}, {pipeline_mode = #tpu.pipeline_mode<synchronous>, transform_indices = @transform_1, window_bounds = array<i64: 4, 8, 2>}, {pipeline_mode = #tpu.pipeline_mode<synchronous>, transform_indices = @transform_2, window_bounds = array<i64: 4, 2>}, {transform_indices = @transform_3, window_bounds = array<i64: 8, 4>}, {transform_indices = @transform_4, window_bounds = array<i64: 8, 2>}]} {
    %c0_i32 = arith.constant 0 : i32
    %0 = arith.cmpi eq, %arg1, %c0_i32 : i32
    %1 = arith.extui %0 : i1 to i32
    %c0_i32_0 = arith.constant 0 : i32
    %2 = arith.cmpi ne, %1, %c0_i32_0 : i32
    scf.if %2 {
      %cst = arith.constant 0.000000e+00 : f32
      %13 = vector.broadcast %cst : f32 to vector<8x32x128xf32>
      %c0_11 = arith.constant 0 : index
      %c0_12 = arith.constant 0 : index
      %c0_13 = arith.constant 0 : index
      %14 = vector.load %arg7[%c0_11, %c0_12, %c0_13] : memref<8x32x128xf32, #tpu.memory_space<vmem>>, vector<8x32x128xf32>
      tpu.vector_store %arg7[%c0_11, %c0_12, %c0_13], %13 {strides = array<i32>} : memref<8x32x128xf32, #tpu.memory_space<vmem>>, vector<8x32x128xf32>,
    } else {
    }
    %c0_i32_1 = arith.constant 0 : i32
    %c128_i32 = arith.constant 128 : i32
    %3 = arith.muli %c0_i32_1, %c128_i32 : i32
    %4 = tpu.assume_multiple %3, 128 : i32
    %c0 = arith.constant 0 : index
    %c0_2 = arith.constant 0 : index
    %c0_3 = arith.constant 0 : index
    %5 = vector.load %arg7[%c0, %c0_2, %c0_3] : memref<8x32x128xf32, #tpu.memory_space<vmem>>, vector<8x32x128xf32>
    %c0_4 = arith.constant 0 : index
    %c0_5 = arith.constant 0 : index
    %6 = arith.index_cast %4 : i32 to index
    %7 = vector.load %arg2[%c0_4, %c0_5, %6] : memref<8x32x128xf32, #tpu.memory_space<vmem>>, vector<8x32x128xf32>
    %8 = arith.addf %5, %7 : vector<8x32x128xf32>
    %c0_6 = arith.constant 0 : index
    %c0_7 = arith.constant 0 : index
    %c0_8 = arith.constant 0 : index
    %9 = vector.load %arg7[%c0_6, %c0_7, %c0_8] : memref<8x32x128xf32, #tpu.memory_space<vmem>>, vector<8x32x128xf32>
    tpu.vector_store %arg7[%c0_6, %c0_7, %c0_8], %8 {strides = array<i32>} : memref<8x32x128xf32, #tpu.memory_space<vmem>>, vector<8x32x128xf32>,
    %c1_i32 = arith.constant 1 : i32
    %c1_i32_9 = arith.constant 1 : i32
    %10 = arith.cmpi eq, %arg1, %c1_i32_9 : i32
    %11 = arith.extui %10 : i1 to i32
    %c0_i32_10 = arith.constant 0 : i32
    %12 = arith.cmpi ne, %11, %c0_i32_10 : i32
    scf.if %12 {
      %c0_11 = arith.constant 0 : index
      %c0_12 = arith.constant 0 : index
      %c0_13 = arith.constant 0 : index
      %13 = vector.load %arg7[%c0_11, %c0_12, %c0_13] : memref<8x32x128xf32, #tpu.memory_space<vmem>>, vector<8x32x128xf32>
      %cst = arith.constant dense<0.000000e+00> : vector<8x32xf32>
      %14 = vector.multi_reduction <add>, %13, %cst [2] : vector<8x32x128xf32> to vector<8x32xf32>
      %c0_14 = arith.constant 0 : index
      %c0_15 = arith.constant 0 : index
      %c0_16 = arith.constant 0 : index
      %15 = vector.load %arg3[%c0_14, %c0_15, %c0_16] : memref<4x8x2xf32, #tpu.memory_space<vmem>>, vector<4x8x2xf32>
      %c0_17 = arith.constant 0 : index
      %c0_18 = arith.constant 0 : index
      %16 = vector.load %arg4[%c0_17, %c0_18] : memref<4x2xf32, #tpu.memory_space<vmem>>, vector<4x2xf32>
      %17 = vector.extract_strided_slice %14 {offsets = [0, 0], sizes = [8, 8], strides = [1, 1]} : vector<8x32xf32> to vector<8x8xf32>
      %18 = vector.extract_strided_slice %15 {offsets = [0, 0, 0], sizes = [1, 8, 2], strides = [1, 1, 1]} : vector<4x8x2xf32> to vector<1x8x2xf32>
      %19 = vector.shape_cast %18 : vector<1x8x2xf32> to vector<8x2xf32>
      %cst_19 = arith.constant dense<0.000000e+00> : vector<8x2xf32>
      %20 = tpu.matmul %17, %19, %cst_19 {dimension_numbers = #tpu.dot_dimension_numbers<[1], [0], [0], [1], [0, 0, 1, 1], [], []>} : vector<8x8xf32>, vector<8x2xf32>, vector<8x2xf32> -> vector<8x2xf32>
      %21 = vector.extract_strided_slice %16 {offsets = [0, 0], sizes = [1, 2], strides = [1, 1]} : vector<4x2xf32> to vector<1x2xf32>
      %22 = vector.broadcast %21 : vector<1x2xf32> to vector<8x2xf32>
      %23 = arith.addf %20, %22 : vector<8x2xf32>
      %24 = vector.extract_strided_slice %14 {offsets = [0, 8], sizes = [8, 8], strides = [1, 1]} : vector<8x32xf32> to vector<8x8xf32>
      %25 = vector.extract_strided_slice %15 {offsets = [1, 0, 0], sizes = [1, 8, 2], strides = [1, 1, 1]} : vector<4x8x2xf32> to vector<1x8x2xf32>
      %26 = vector.shape_cast %25 : vector<1x8x2xf32> to vector<8x2xf32>
      %cst_20 = arith.constant dense<0.000000e+00> : vector<8x2xf32>
      %27 = tpu.matmul %24, %26, %cst_20 {dimension_numbers = #tpu.dot_dimension_numbers<[1], [0], [0], [1], [0, 0, 1, 1], [], []>} : vector<8x8xf32>, vector<8x2xf32>, vector<8x2xf32> -> vector<8x2xf32>
      %28 = vector.extract_strided_slice %16 {offsets = [1, 0], sizes = [1, 2], strides = [1, 1]} : vector<4x2xf32> to vector<1x2xf32>
      %29 = vector.broadcast %28 : vector<1x2xf32> to vector<8x2xf32>
      %30 = arith.addf %27, %29 : vector<8x2xf32>
      %31 = vector.extract_strided_slice %14 {offsets = [0, 16], sizes = [8, 8], strides = [1, 1]} : vector<8x32xf32> to vector<8x8xf32>
      %32 = vector.extract_strided_slice %15 {offsets = [2, 0, 0], sizes = [1, 8, 2], strides = [1, 1, 1]} : vector<4x8x2xf32> to vector<1x8x2xf32>
      %33 = vector.shape_cast %32 : vector<1x8x2xf32> to vector<8x2xf32>
      %cst_21 = arith.constant dense<0.000000e+00> : vector<8x2xf32>
      %34 = tpu.matmul %31, %33, %cst_21 {dimension_numbers = #tpu.dot_dimension_numbers<[1], [0], [0], [1], [0, 0, 1, 1], [], []>} : vector<8x8xf32>, vector<8x2xf32>, vector<8x2xf32> -> vector<8x2xf32>
      %35 = vector.extract_strided_slice %16 {offsets = [2, 0], sizes = [1, 2], strides = [1, 1]} : vector<4x2xf32> to vector<1x2xf32>
      %36 = vector.broadcast %35 : vector<1x2xf32> to vector<8x2xf32>
      %37 = arith.addf %34, %36 : vector<8x2xf32>
      %38 = vector.extract_strided_slice %14 {offsets = [0, 24], sizes = [8, 8], strides = [1, 1]} : vector<8x32xf32> to vector<8x8xf32>
      %39 = vector.extract_strided_slice %15 {offsets = [3, 0, 0], sizes = [1, 8, 2], strides = [1, 1, 1]} : vector<4x8x2xf32> to vector<1x8x2xf32>
      %40 = vector.shape_cast %39 : vector<1x8x2xf32> to vector<8x2xf32>
      %cst_22 = arith.constant dense<0.000000e+00> : vector<8x2xf32>
      %41 = tpu.matmul %38, %40, %cst_22 {dimension_numbers = #tpu.dot_dimension_numbers<[1], [0], [0], [1], [0, 0, 1, 1], [], []>} : vector<8x8xf32>, vector<8x2xf32>, vector<8x2xf32> -> vector<8x2xf32>
      %42 = vector.extract_strided_slice %16 {offsets = [3, 0], sizes = [1, 2], strides = [1, 1]} : vector<4x2xf32> to vector<1x2xf32>
      %43 = vector.broadcast %42 : vector<1x2xf32> to vector<8x2xf32>
      %44 = arith.addf %41, %43 : vector<8x2xf32>
      %45 = arith.addf %23, %30 : vector<8x2xf32>
      %46 = arith.addf %45, %37 : vector<8x2xf32>
      %47 = arith.addf %46, %44 : vector<8x2xf32>
      %c0_23 = arith.constant 0 : index
      %c0_24 = arith.constant 0 : index
      %48 = vector.load %arg6[%c0_23, %c0_24] : memref<8x2xf32, #tpu.memory_space<vmem>>, vector<8x2xf32>
      tpu.vector_store %arg6[%c0_23, %c0_24], %47 {strides = array<i32>} : memref<8x2xf32, #tpu.memory_space<vmem>>, vector<8x2xf32>,
      %cst_25 = arith.constant dense<0xFF800000> : vector<8xf32>
      %49 = vector.multi_reduction <maximumf>, %23, %cst_25 [1] : vector<8x2xf32> to vector<8xf32>
      %50 = vector.shape_cast %49 : vector<8xf32> to vector<8x1xf32>
      %51 = vector.broadcast %50 : vector<8x1xf32> to vector<8x2xf32>
      %52 = arith.subf %23, %51 : vector<8x2xf32>
      %53 = math.exp %52 : vector<8x2xf32>
      %cst_26 = arith.constant dense<0.000000e+00> : vector<8xf32>
      %54 = vector.multi_reduction <add>, %53, %cst_26 [1] : vector<8x2xf32> to vector<8xf32>
      %55 = vector.shape_cast %54 : vector<8xf32> to vector<8x1xf32>
      %56 = vector.broadcast %55 : vector<8x1xf32> to vector<8x2xf32>
      %57 = arith.divf %53, %56 : vector<8x2xf32>
      %58 = vector.extract_strided_slice %57 {offsets = [0, 0], sizes = [8, 1], strides = [1, 1]} : vector<8x2xf32> to vector<8x1xf32>
      %59 = vector.broadcast %58 : vector<8x1xf32> to vector<8x2xf32>
      %60 = arith.subf %57, %59 : vector<8x2xf32>
      %61 = math.absf %60 : vector<8x2xf32>
      %cst_27 = arith.constant dense<0.000000e+00> : vector<8xf32>
      %62 = vector.multi_reduction <add>, %61, %cst_27 [1] : vector<8x2xf32> to vector<8xf32>
      %63 = vector.shape_cast %62 : vector<8xf32> to vector<8x1xf32>
      %cst_28 = arith.constant dense<0xFF800000> : vector<8xf32>
      %64 = vector.multi_reduction <maximumf>, %30, %cst_28 [1] : vector<8x2xf32> to vector<8xf32>
      %65 = vector.shape_cast %64 : vector<8xf32> to vector<8x1xf32>
      %66 = vector.broadcast %65 : vector<8x1xf32> to vector<8x2xf32>
      %67 = arith.subf %30, %66 : vector<8x2xf32>
      %68 = math.exp %67 : vector<8x2xf32>
      %cst_29 = arith.constant dense<0.000000e+00> : vector<8xf32>
      %69 = vector.multi_reduction <add>, %68, %cst_29 [1] : vector<8x2xf32> to vector<8xf32>
      %70 = vector.shape_cast %69 : vector<8xf32> to vector<8x1xf32>
      %71 = vector.broadcast %70 : vector<8x1xf32> to vector<8x2xf32>
      %72 = arith.divf %68, %71 : vector<8x2xf32>
      %73 = vector.extract_strided_slice %72 {offsets = [0, 0], sizes = [8, 1], strides = [1, 1]} : vector<8x2xf32> to vector<8x1xf32>
      %74 = vector.broadcast %73 : vector<8x1xf32> to vector<8x2xf32>
      %75 = arith.subf %72, %74 : vector<8x2xf32>
      %76 = math.absf %75 : vector<8x2xf32>
      %cst_30 = arith.constant dense<0.000000e+00> : vector<8xf32>
      %77 = vector.multi_reduction <add>, %76, %cst_30 [1] : vector<8x2xf32> to vector<8xf32>
      %78 = vector.shape_cast %77 : vector<8xf32> to vector<8x1xf32>
      %cst_31 = arith.constant dense<0xFF800000> : vector<8xf32>
      %79 = vector.multi_reduction <maximumf>, %37, %cst_31 [1] : vector<8x2xf32> to vector<8xf32>
      %80 = vector.shape_cast %79 : vector<8xf32> to vector<8x1xf32>
      %81 = vector.broadcast %80 : vector<8x1xf32> to vector<8x2xf32>
      %82 = arith.subf %37, %81 : vector<8x2xf32>
      %83 = math.exp %82 : vector<8x2xf32>
      %cst_32 = arith.constant dense<0.000000e+00> : vector<8xf32>
      %84 = vector.multi_reduction <add>, %83, %cst_32 [1] : vector<8x2xf32> to vector<8xf32>
      %85 = vector.shape_cast %84 : vector<8xf32> to vector<8x1xf32>
      %86 = vector.broadcast %85 : vector<8x1xf32> to vector<8x2xf32>
      %87 = arith.divf %83, %86 : vector<8x2xf32>
      %88 = vector.extract_strided_slice %87 {offsets = [0, 0], sizes = [8, 1], strides = [1, 1]} : vector<8x2xf32> to vector<8x1xf32>
      %89 = vector.broadcast %88 : vector<8x1xf32> to vector<8x2xf32>
      %90 = arith.subf %87, %89 : vector<8x2xf32>
      %91 = math.absf %90 : vector<8x2xf32>
      %cst_33 = arith.constant dense<0.000000e+00> : vector<8xf32>
      %92 = vector.multi_reduction <add>, %91, %cst_33 [1] : vector<8x2xf32> to vector<8xf32>
      %93 = vector.shape_cast %92 : vector<8xf32> to vector<8x1xf32>
      %cst_34 = arith.constant dense<0xFF800000> : vector<8xf32>
      %94 = vector.multi_reduction <maximumf>, %44, %cst_34 [1] : vector<8x2xf32> to vector<8xf32>
      %95 = vector.shape_cast %94 : vector<8xf32> to vector<8x1xf32>
      %96 = vector.broadcast %95 : vector<8x1xf32> to vector<8x2xf32>
      %97 = arith.subf %44, %96 : vector<8x2xf32>
      %98 = math.exp %97 : vector<8x2xf32>
      %cst_35 = arith.constant dense<0.000000e+00> : vector<8xf32>
      %99 = vector.multi_reduction <add>, %98, %cst_35 [1] : vector<8x2xf32> to vector<8xf32>
      %100 = vector.shape_cast %99 : vector<8xf32> to vector<8x1xf32>
      %101 = vector.broadcast %100 : vector<8x1xf32> to vector<8x2xf32>
      %102 = arith.divf %98, %101 : vector<8x2xf32>
      %103 = vector.extract_strided_slice %102 {offsets = [0, 0], sizes = [8, 1], strides = [1, 1]} : vector<8x2xf32> to vector<8x1xf32>
      %104 = vector.broadcast %103 : vector<8x1xf32> to vector<8x2xf32>
      %105 = arith.subf %102, %104 : vector<8x2xf32>
      %106 = math.absf %105 : vector<8x2xf32>
      %cst_36 = arith.constant dense<0.000000e+00> : vector<8xf32>
      %107 = vector.multi_reduction <add>, %106, %cst_36 [1] : vector<8x2xf32> to vector<8xf32>
      %108 = vector.shape_cast %107 : vector<8xf32> to vector<8x1xf32>
      %109 = arith.maximumf %63, %78 : vector<8x1xf32>
      %110 = arith.maximumf %109, %93 : vector<8x1xf32>
      %111 = arith.maximumf %110, %108 : vector<8x1xf32>
      %112 = arith.subf %63, %111 : vector<8x1xf32>
      %113 = math.exp %112 : vector<8x1xf32>
      %114 = arith.subf %78, %111 : vector<8x1xf32>
      %115 = math.exp %114 : vector<8x1xf32>
      %116 = arith.subf %93, %111 : vector<8x1xf32>
      %117 = math.exp %116 : vector<8x1xf32>
      %118 = arith.subf %108, %111 : vector<8x1xf32>
      %119 = math.exp %118 : vector<8x1xf32>
      %120 = arith.addf %113, %115 : vector<8x1xf32>
      %121 = arith.addf %120, %117 : vector<8x1xf32>
      %122 = arith.addf %121, %119 : vector<8x1xf32>
      %cst_37 = arith.constant 1.000000e+00 : f32
      %123 = vector.broadcast %cst_37 : f32 to vector<8x1xf32>
      %124 = arith.divf %123, %122 : vector<8x1xf32>
      %125 = arith.mulf %113, %124 : vector<8x1xf32>
      %126 = arith.mulf %115, %124 : vector<8x1xf32>
      %127 = arith.mulf %117, %124 : vector<8x1xf32>
      %128 = arith.mulf %119, %124 : vector<8x1xf32>
      %129 = tpu.concatenate %125, %126, %127, %128 in 1 : vector<8x1xf32>, vector<8x1xf32>, vector<8x1xf32>, vector<8x1xf32> -> vector<8x4xf32>
      %c0_38 = arith.constant 0 : index
      %c0_39 = arith.constant 0 : index
      %130 = vector.load %arg5[%c0_38, %c0_39] : memref<8x4xf32, #tpu.memory_space<vmem>>, vector<8x4xf32>
      tpu.vector_store %arg5[%c0_38, %c0_39], %129 {strides = array<i32>} : memref<8x4xf32, #tpu.memory_space<vmem>>, vector<8x4xf32>,
    } else {
    }
    return
  }
  func.func @transform_0(%arg0: i32, %arg1: i32) -> (i32, i32, i32) {
    %c0_i32 = arith.constant 0 : i32
    %c0_i32_0 = arith.constant 0 : i32
    return %arg0, %c0_i32, %arg1 : i32, i32, i32
  }
  func.func @transform_1(%arg0: i32, %arg1: i32) -> (i32, i32, i32) {
    %c0_i32 = arith.constant 0 : i32
    %c0_i32_0 = arith.constant 0 : i32
    %c0_i32_1 = arith.constant 0 : i32
    %c0_i32_2 = arith.constant 0 : i32
    return %c0_i32, %c0_i32_0, %c0_i32_1 : i32, i32, i32
  }
  func.func @transform_2(%arg0: i32, %arg1: i32) -> (i32, i32) {
    %c0_i32 = arith.constant 0 : i32
    %c0_i32_0 = arith.constant 0 : i32
    %c0_i32_1 = arith.constant 0 : i32
    return %c0_i32, %c0_i32_0 : i32, i32
  }
  func.func @transform_3(%arg0: i32, %arg1: i32) -> (i32, i32) {
    %c0_i32 = arith.constant 0 : i32
    %c0_i32_0 = arith.constant 0 : i32
    return %arg0, %c0_i32 : i32, i32
  }
  func.func @transform_4(%arg0: i32, %arg1: i32) -> (i32, i32) {
    %c0_i32 = arith.constant 0 : i32
    %c0_i32_0 = arith.constant 0 : i32
    return %arg0, %c0_i32 : i32, i32
  }
}

</mosaic_0001>

<llo_original>
// kernel: tpu_custom_call.1
$region0: #{tpu_custom_call.1}
  #allocation0 [shape = 'u32[]', space=smem, size = 0x4, offset = 0x4, fixed_abs, tag = 'smem constant byte address 0x4 - core index']
  #allocation1 [shape = 'u32[144,128]{1,0:T(1,128)}', space=vmem, size = 0x12000, scoped, tag = 'internal scratch']
  #allocation2 [shape = 'f32[8,32,128]{2,1,0:T(8,128)}', space=vmem, size = 0x20000, scoped, tag = 'scratch operand']
  %s0 = inlined_call_operand.hbm [shape: f32[16,32,256], index: 0, kind: input, shape index: {}]
  %s1 = inlined_call_operand.vmem [shape: f32[4,8,2], index: 1, kind: input, shape index: {}]
  %s2 = inlined_call_operand.vmem [shape: f32[4,2], index: 2, kind: input, shape index: {}]
  %s3 = inlined_call_operand.vmem [shape: f32[16,4], index: 3, kind: output, shape index: {0}]
  %s4 = inlined_call_operand.vmem [shape: f32[16,2], index: 4, kind: output, shape index: {1}]
  %5 = xla_tuple %s3, %s4
  %s6 = sld [smem:[#allocation0]]
  $region65: #{tpu_custom_call.1} parent=0
    _
  %s8 = ssub.s32 1, %s6
  %s9 = scalar_select 0, %s8, %s6
  $region1: #{tpu_custom_call.1} parent=0
    #allocation3 [shape = 'u8[262144]{0}', space=vmem, size = 0x40000, scoped, tag = 'input window, operand 0']
    #allocation4 [shape = 's32[2]{0}', space=sflag, size = 0x8, scoped, tag = 'scoped memory for tpu_custom_call.1']
    %10 = vsyncpa [#allocation4], 0
    %s11 = scalar_lea.sflag [#allocation4], 1
    %12 = vsyncpa %s11, 0
    loop: start=0, step=1, limit=6
    $region2: #{tpu_custom_call.1} parent=1 // loop_pre_header
      _
    $region3: #{tpu_custom_call.1} parent=1 // loop_header
      %s14 = sphi 0, %s18
      %p15 = scmp.ge.s32.totalorder %s14, 6
      %s21 = sphi 0, %s33
      %s22 = sphi 0, %s29
      %s23 = sphi 0, %s21
      %s24 = sphi 0, %s22
      %s25 = sphi 0, %s23
      %s26 = sphi 0, %s24
      %s38 = sphi 0, %s40
      %s41 = sphi 0, %s38
      %s42 = sphi 0, %s41
      %s58 = sphi 0, %s42
      %s62 = sphi 0, %s62
      %s64 = sphi 0, %s62
      %s65 = sphi 0, %s64
      %s79 = sphi 0, %s65
      %s83 = sphi 0, %s83
      %s85 = sphi 0, %s83
      %s86 = sphi 0, %s85
      %s100 = sphi 0, %s86
      %s106 = sphi 0, %s108
      %s109 = sphi 0, %s106
      %s110 = sphi 0, %s109
      %s126 = sphi 0, %s110
      %s132 = sphi 0, %s134
      %s135 = sphi 0, %s132
      %s136 = sphi 0, %s135
      %s152 = sphi 0, %s136
    $region4: #{tpu_custom_call.1} parent=1 // loop_header_branch
      %17 = sbr.rel (%p15) target = $region8
    $region5: #{tpu_custom_call.1} parent=1 // loop_body
      %s19 = ssub.s32 %s14, 1
      %s20 = ssub.s32 %s14, 2
      %s27 = sadd.s32 1, %s22
      %p28 = scmp.ge.s32.totalorder %s27, 2
      %s29 = scalar_select %p28, 0, %s27
      %s30 = sadd.s32 1, %s21
      %s31 = scalar_select %p28, %s30, %s21
      %p32 = scmp.ge.s32.totalorder %s31, 2
      %s33 = scalar_select %p32, 0, %s31
      %s34 = ssub.s32 %s21, %s33
      %s35 = ssub.s32 %s22, %s29
      %s36 = sor.u32 %s34, %s35
      %p37 = scmp.eq.s32.totalorder %s36, 0
      %s39 = sadd.s32 %s38, 1
      %s40 = scalar_select %p37, %s38, %s39
      %p43 = pneg %p37
      %p44 = scmp.eq.s32.totalorder %s14, 3
      %p45 = por %p43, %p44
      %p46 = scmp.ne.s32.totalorder %s38, %s41
      %p47 = scmp.eq.s32.totalorder %s14, 0
      %p48 = por %p46, %p47
      %p49 = scmp.ne.s32.totalorder %s38, %s41
      %p50 = scmp.eq.s32.totalorder %s19, 3
      %p51 = por %p49, %p50
      %p52 = scmp.ne.s32.totalorder %s41, %s42
      %p53 = scmp.eq.s32.totalorder %s19, 0
      %p54 = por %p52, %p53
      %p55 = scmp.ne.s32.totalorder %s41, %s42
      %p56 = scmp.eq.s32.totalorder %s20, 3
      %p57 = por %p55, %p56
      %p59 = scmp.ne.s32.totalorder %s42, %s58
      %p60 = scmp.eq.s32.totalorder %s20, 0
      %p61 = por %p59, %p60
      %s63 = sadd.s32 %s62, 1
      %p66 = scmp.eq.s32.totalorder %s14, 3
      %p67 = scmp.ne.s32.totalorder %s62, %s64
      %p68 = scmp.eq.s32.totalorder %s14, 0
      %p69 = por %p67, %p68
      %p70 = scmp.ne.s32.totalorder %s62, %s64
      %p71 = scmp.eq.s32.totalorder %s19, 3
      %p72 = por %p70, %p71
      %p73 = scmp.ne.s32.totalorder %s64, %s65
      %p74 = scmp.eq.s32.totalorder %s19, 0
      %p75 = por %p73, %p74
      %p76 = scmp.ne.s32.totalorder %s64, %s65
      %p77 = scmp.eq.s32.totalorder %s20, 3
      %p78 = por %p76, %p77
      %p80 = scmp.ne.s32.totalorder %s65, %s79
      %p81 = scmp.eq.s32.totalorder %s20, 0
      %p82 = por %p80, %p81
      %s84 = sadd.s32 %s83, 1
      %p87 = scmp.eq.s32.totalorder %s14, 3
      %p88 = scmp.ne.s32.totalorder %s83, %s85
      %p89 = scmp.eq.s32.totalorder %s14, 0
      %p90 = por %p88, %p89
      %p91 = scmp.ne.s32.totalorder %s83, %s85
      %p92 = scmp.eq.s32.totalorder %s19, 3
      %p93 = por %p91, %p92
      %p94 = scmp.ne.s32.totalorder %s85, %s86
      %p95 = scmp.eq.s32.totalorder %s19, 0
      %p96 = por %p94, %p95
      %p97 = scmp.ne.s32.totalorder %s85, %s86
      %p98 = scmp.eq.s32.totalorder %s20, 3
      %p99 = por %p97, %p98
      %p101 = scmp.ne.s32.totalorder %s86, %s100
      %p102 = scmp.eq.s32.totalorder %s20, 0
      %p103 = por %p101, %p102
      %s104 = ssub.s32 %s21, %s33
      %p105 = scmp.eq.s32.totalorder %s104, 0
      %s107 = sadd.s32 %s106, 1
      %s108 = scalar_select %p105, %s106, %s107
      %p111 = pneg %p105
      %p112 = scmp.eq.s32.totalorder %s14, 3
      %p113 = por %p111, %p112
      %p114 = scmp.ne.s32.totalorder %s106, %s109
      %p115 = scmp.eq.s32.totalorder %s14, 0
      %p116 = por %p114, %p115
      %p117 = scmp.ne.s32.totalorder %s106, %s109
      %p118 = scmp.eq.s32.totalorder %s19, 3
      %p119 = por %p117, %p118
      %p120 = scmp.ne.s32.totalorder %s109, %s110
      %p121 = scmp.eq.s32.totalorder %s19, 0
      %p122 = por %p120, %p121
      %p123 = scmp.ne.s32.totalorder %s109, %s110
      %p124 = scmp.eq.s32.totalorder %s20, 3
      %p125 = por %p123, %p124
      %p127 = scmp.ne.s32.totalorder %s110, %s126
      %p128 = scmp.eq.s32.totalorder %s20, 0
      %p129 = por %p127, %p128
      %s130 = ssub.s32 %s21, %s33
      %p131 = scmp.eq.s32.totalorder %s130, 0
      %s133 = sadd.s32 %s132, 1
      %s134 = scalar_select %p131, %s132, %s133
      %p137 = pneg %p131
      %p138 = scmp.eq.s32.totalorder %s14, 3
      %p139 = por %p137, %p138
      %p140 = scmp.ne.s32.totalorder %s132, %s135
      %p141 = scmp.eq.s32.totalorder %s14, 0
      %p142 = por %p140, %p141
      %p143 = scmp.ne.s32.totalorder %s132, %s135
      %p144 = scmp.eq.s32.totalorder %s19, 3
      %p145 = por %p143, %p144
      %p146 = scmp.ne.s32.totalorder %s135, %s136
      %p147 = scmp.eq.s32.totalorder %s19, 0
      %p148 = por %p146, %p147
      %p149 = scmp.ne.s32.totalorder %s135, %s136
      %p150 = scmp.eq.s32.totalorder %s20, 3
      %p151 = por %p149, %p150
      %p153 = scmp.ne.s32.totalorder %s136, %s152
      %p154 = scmp.eq.s32.totalorder %s20, 0
      %p155 = por %p153, %p154
      %p156 = scmp.le.s32.totalorder 1, %s14
      %p157 = scmp.lt.s32.totalorder %s14, 5
      %p158 = pnand %p156, %p157
      %p159 = pneg %p158
      // Predicated region
      $region9: #{tpu_custom_call.1} parent=5 // pred_check
        _
      $region10: #{tpu_custom_call.1} parent=5 // pred_check_branch
        %161 = sbr.rel (%p158) target = $region12
      $region11: #{tpu_custom_call.1} parent=5 // pred_region
        %s162 = ssub.s32 %s14, 1
        // Predicated region
        $region13: #{tpu_custom_call.1} parent=11 // pred_check
          %p163 = pneg %p75
        $region14: #{tpu_custom_call.1} parent=11 // pred_check_branch
          %165 = sbr.rel (%p163) target = $region16
        $region15: #{tpu_custom_call.1} parent=11 // pred_region
          _
        $region16: #{tpu_custom_call.1} parent=11 // pred_fallthru
          _
        // Predicated region
        $region17: #{tpu_custom_call.1} parent=11 // pred_check
          %p166 = pneg %p96
        $region18: #{tpu_custom_call.1} parent=11 // pred_check_branch
          %168 = sbr.rel (%p166) target = $region20
        $region19: #{tpu_custom_call.1} parent=11 // pred_region
          _
        $region20: #{tpu_custom_call.1} parent=11 // pred_fallthru
          _
      $region12: #{tpu_custom_call.1} parent=5 // pred_fallthru
        _
      %p169 = scmp.lt.s32.totalorder %s14, 4
      // Predicated region
      $region21: #{tpu_custom_call.1} parent=5 // pred_check
        %p170 = pneg %p169
      $region22: #{tpu_custom_call.1} parent=5 // pred_check_branch
        %172 = sbr.rel (%p170) target = $region24
      $region23: #{tpu_custom_call.1} parent=5 // pred_region
        // Predicated region
        $region25: #{tpu_custom_call.1} parent=23 // pred_check
          %p173 = pneg %p48
        $region26: #{tpu_custom_call.1} parent=23 // pred_check_branch
          %175 = sbr.rel (%p173) target = $region28
        $region27: #{tpu_custom_call.1} parent=23 // pred_region
          %s176 = sand.u32 %s38, 1
          %s177 = scalar_lea.sflag [#allocation4], %s176
          %s178 = sand.u32 %s38, 1
          %s179 = smul.addr %s178, 256
          %s180 = scalar_lea.vmem [#allocation3], %s179
          %s181 = smul.u32 8, %s21
          %s183 = ssub.s32 4096, 4096
          %184 = vsyncadd %s177, %s183
          %s185 = smul.addr %s181, 8
          %s186 = sadd.s32 %s22, %s185
          %s187 = smul.addr %s186, 128
          %s188 = scalar_lea.hbm %s0, %s187
          %s189 = sshll.u32 %s180, 4
          %s190 = int_to_ptr.vmem [resolvable:$true] %s189
          %195 = dma.hbm_to_vmem [thread:$0]  %s188, 4096, %s190, %s177, 256, 128, 8
        $region28: #{tpu_custom_call.1} parent=23 // pred_fallthru
          _
      $region24: #{tpu_custom_call.1} parent=5 // pred_fallthru
        _
      %p196 = scmp.le.s32.totalorder 1, %s14
      %p197 = scmp.lt.s32.totalorder %s14, 5
      %p198 = pnand %p196, %p197
      %p199 = pneg %p198
      // Predicated region
      $region29: #{tpu_custom_call.1} parent=5 // pred_check
        _
      $region30: #{tpu_custom_call.1} parent=5 // pred_check_branch
        %201 = sbr.rel (%p198) target = $region32
      $region31: #{tpu_custom_call.1} parent=5 // pred_region
        %s202 = ssub.s32 %s14, 1
        %s203 = sand.u32 %s41, 1
        %s204 = scalar_lea.sflag [#allocation4], %s203
        %s205 = sand.u32 %s41, 1
        %s206 = smul.addr %s205, 256
        %s207 = scalar_lea.vmem [#allocation3], %s206
        // Predicated region
        $region33: #{tpu_custom_call.1} parent=31 // pred_check
          %p208 = pneg %p54
        $region34: #{tpu_custom_call.1} parent=31 // pred_check_branch
          %210 = sbr.rel (%p208) target = $region36
        $region35: #{tpu_custom_call.1} parent=31 // pred_region
          %211 = dma.done %s204, 4096
        $region36: #{tpu_custom_call.1} parent=31 // pred_fallthru
          _
        %s212 = sand.u32 %s41, 1
        %s213 = scalar_lea.sflag [#allocation4], %s212
        %s214 = sand.u32 %s41, 1
        %s215 = smul.addr %s214, 256
        %s216 = scalar_lea.vmem [#allocation3], %s215
        %p217 = pneg %p54
        %p218 = pneg %p51
        %p219 = pneg %p75
        %p220 = pneg %p72
        %p221 = pneg %p96
        %p222 = pneg %p93
        %p223 = pneg %p122
        %p224 = pneg %p119
        %p225 = scmp.lt.s32.totalorder %s23, 1
        %s226 = scalar_select %p225, %s23, 1
        %s227 = smul.addr %s226, 8
        %s228 = scalar_lea.vmem %s3, %s227
        %p229 = pneg %p148
        %p230 = pneg %p145
        %p231 = scmp.lt.s32.totalorder %s23, 1
        %s232 = scalar_select %p231, %s23, 1
        %s233 = smul.addr %s232, 8
        %s234 = scalar_lea.vmem %s4, %s233
        %s235 = smul.u32 8, %s23
        %p236 = scmp.lt.s32.totalorder %s23, 1
        %s237 = scalar_select %p236, %s23, 1
        %s238 = smul.addr %s237, 8
        %s239 = scalar_lea.vmem %s3, %s238
        %p240 = scmp.lt.s32.totalorder %s23, 1
        %s241 = scalar_select %p240, %s23, 1
        %s242 = smul.addr %s241, 8
        %s243 = scalar_lea.vmem %s4, %s242
        %p244 = scmp.eq.s32.totalorder %s24, 0
        // Predicated region
        $region37: #{tpu_custom_call.1} parent=31 // pred_check
          %p245 = pneg %p244
        $region38: #{tpu_custom_call.1} parent=31 // pred_check_branch
          %247 = sbr.rel (%p245) target = $region40
        $region39: #{tpu_custom_call.1} parent=31 // pred_region
          %248 = vst [vmem:[#allocation2] sm:$0xff] 0.0
          %249 = vst [vmem:[#allocation2 + $0x8] sm:$0xff] 0.0
          %250 = vst [vmem:[#allocation2 + $0x10] sm:$0xff] 0.0
          %251 = vst [vmem:[#allocation2 + $0x18] sm:$0xff] 0.0
          %252 = vst [vmem:[#allocation2 + $0x20] sm:$0xff] 0.0
          %253 = vst [vmem:[#allocation2 + $0x28] sm:$0xff] 0.0
          %254 = vst [vmem:[#allocation2 + $0x30] sm:$0xff] 0.0
          %255 = vst [vmem:[#allocation2 + $0x38] sm:$0xff] 0.0
          %256 = vst [vmem:[#allocation2 + $0x40] sm:$0xff] 0.0
          %257 = vst [vmem:[#allocation2 + $0x48] sm:$0xff] 0.0
          %258 = vst [vmem:[#allocation2 + $0x50] sm:$0xff] 0.0
          %259 = vst [vmem:[#allocation2 + $0x58] sm:$0xff] 0.0
          %260 = vst [vmem:[#allocation2 + $0x60] sm:$0xff] 0.0
          %261 = vst [vmem:[#allocation2 + $0x68] sm:$0xff] 0.0
          %262 = vst [vmem:[#allocation2 + $0x70] sm:$0xff] 0.0
          %263 = vst [vmem:[#allocation2 + $0x78] sm:$0xff] 0.0
          %264 = vst [vmem:[#allocation2 + $0x80] sm:$0xff] 0.0
          %265 = vst [vmem:[#allocation2 + $0x88] sm:$0xff] 0.0
          %266 = vst [vmem:[#allocation2 + $0x90] sm:$0xff] 0.0
          %267 = vst [vmem:[#allocation2 + $0x98] sm:$0xff] 0.0
          %268 = vst [vmem:[#allocation2 + $0xa0] sm:$0xff] 0.0
          %269 = vst [vmem:[#allocation2 + $0xa8] sm:$0xff] 0.0
          %270 = vst [vmem:[#allocation2 + $0xb0] sm:$0xff] 0.0
          %271 = vst [vmem:[#allocation2 + $0xb8] sm:$0xff] 0.0
          %272 = vst [vmem:[#allocation2 + $0xc0] sm:$0xff] 0.0
          %273 = vst [vmem:[#allocation2 + $0xc8] sm:$0xff] 0.0
          %274 = vst [vmem:[#allocation2 + $0xd0] sm:$0xff] 0.0
          %275 = vst [vmem:[#allocation2 + $0xd8] sm:$0xff] 0.0
          %276 = vst [vmem:[#allocation2 + $0xe0] sm:$0xff] 0.0
          %277 = vst [vmem:[#allocation2 + $0xe8] sm:$0xff] 0.0
          %278 = vst [vmem:[#allocation2 + $0xf0] sm:$0xff] 0.0
          %279 = vst [vmem:[#allocation2 + $0xf8] sm:$0xff] 0.0
        $region40: #{tpu_custom_call.1} parent=31 // pred_fallthru
          _
        %v280 = vld [vmem:[#allocation2] sm:$0xff]
        %v281 = vld [vmem:[#allocation2 + $0x8] sm:$0xff]
        %v282 = vld [vmem:[#allocation2 + $0x10] sm:$0xff]
        %v283 = vld [vmem:[#allocation2 + $0x18] sm:$0xff]
        %v284 = vld [vmem:[#allocation2 + $0x20] sm:$0xff]
        %v285 = vld [vmem:[#allocation2 + $0x28] sm:$0xff]
        %v286 = vld [vmem:[#allocation2 + $0x30] sm:$0xff]
        %v287 = vld [vmem:[#allocation2 + $0x38] sm:$0xff]
        %v288 = vld [vmem:[#allocation2 + $0x40] sm:$0xff]
        %v289 = vld [vmem:[#allocation2 + $0x48] sm:$0xff]
        %v290 = vld [vmem:[#allocation2 + $0x50] sm:$0xff]
        %v291 = vld [vmem:[#allocation2 + $0x58] sm:$0xff]
        %v292 = vld [vmem:[#allocation2 + $0x60] sm:$0xff]
        %v293 = vld [vmem:[#allocation2 + $0x68] sm:$0xff]
        %v294 = vld [vmem:[#allocation2 + $0x70] sm:$0xff]
        %v295 = vld [vmem:[#allocation2 + $0x78] sm:$0xff]
        %v296 = vld [vmem:[#allocation2 + $0x80] sm:$0xff]
        %v297 = vld [vmem:[#allocation2 + $0x88] sm:$0xff]
        %v298 = vld [vmem:[#allocation2 + $0x90] sm:$0xff]
        %v299 = vld [vmem:[#allocation2 + $0x98] sm:$0xff]
        %v300 = vld [vmem:[#allocation2 + $0xa0] sm:$0xff]
        %v301 = vld [vmem:[#allocation2 + $0xa8] sm:$0xff]
        %v302 = vld [vmem:[#allocation2 + $0xb0] sm:$0xff]
        %v303 = vld [vmem:[#allocation2 + $0xb8] sm:$0xff]
        %v304 = vld [vmem:[#allocation2 + $0xc0] sm:$0xff]
        %v305 = vld [vmem:[#allocation2 + $0xc8] sm:$0xff]
        %v306 = vld [vmem:[#allocation2 + $0xd0] sm:$0xff]
        %v307 = vld [vmem:[#allocation2 + $0xd8] sm:$0xff]
        %v308 = vld [vmem:[#allocation2 + $0xe0] sm:$0xff]
        %v309 = vld [vmem:[#allocation2 + $0xe8] sm:$0xff]
        %v310 = vld [vmem:[#allocation2 + $0xf0] sm:$0xff]
        %v311 = vld [vmem:[#allocation2 + $0xf8] sm:$0xff]
        %v312 = vld [vmem:[%s207] sm:$0xff]
        %v313 = vld [vmem:[%s207 + $0x8] sm:$0xff]
        %v314 = vld [vmem:[%s207 + $0x10] sm:$0xff]
        %v315 = vld [vmem:[%s207 + $0x18] sm:$0xff]
        %v316 = vld [vmem:[%s207 + $0x20] sm:$0xff]
        %v317 = vld [vmem:[%s207 + $0x28] sm:$0xff]
        %v318 = vld [vmem:[%s207 + $0x30] sm:$0xff]
        %v319 = vld [vmem:[%s207 + $0x38] sm:$0xff]
        %v320 = vld [vmem:[%s207 + $0x40] sm:$0xff]
        %v321 = vld [vmem:[%s207 + $0x48] sm:$0xff]
        %v322 = vld [vmem:[%s207 + $0x50] sm:$0xff]
        %v323 = vld [vmem:[%s207 + $0x58] sm:$0xff]
        %v324 = vld [vmem:[%s207 + $0x60] sm:$0xff]
        %v325 = vld [vmem:[%s207 + $0x68] sm:$0xff]
        %v326 = vld [vmem:[%s207 + $0x70] sm:$0xff]
        %v327 = vld [vmem:[%s207 + $0x78] sm:$0xff]
        %v328 = vld [vmem:[%s207 + $0x80] sm:$0xff]
        %v329 = vld [vmem:[%s207 + $0x88] sm:$0xff]
        %v330 = vld [vmem:[%s207 + $0x90] sm:$0xff]
        %v331 = vld [vmem:[%s207 + $0x98] sm:$0xff]
        %v332 = vld [vmem:[%s207 + $0xa0] sm:$0xff]
        %v333 = vld [vmem:[%s207 + $0xa8] sm:$0xff]
        %v334 = vld [vmem:[%s207 + $0xb0] sm:$0xff]
        %v335 = vld [vmem:[%s207 + $0xb8] sm:$0xff]
        %v336 = vld [vmem:[%s207 + $0xc0] sm:$0xff]
        %v337 = vld [vmem:[%s207 + $0xc8] sm:$0xff]
        %v338 = vld [vmem:[%s207 + $0xd0] sm:$0xff]
        %v339 = vld [vmem:[%s207 + $0xd8] sm:$0xff]
        %v340 = vld [vmem:[%s207 + $0xe0] sm:$0xff]
        %v341 = vld [vmem:[%s207 + $0xe8] sm:$0xff]
        %v342 = vld [vmem:[%s207 + $0xf0] sm:$0xff]
        %v343 = vld [vmem:[%s207 + $0xf8] sm:$0xff]
        %v344 = vadd.f32 %v280, %v312
        %v345 = vadd.f32 %v281, %v313
        %v346 = vadd.f32 %v282, %v314
        %v347 = vadd.f32 %v283, %v315
        %v348 = vadd.f32 %v284, %v316
        %v349 = vadd.f32 %v285, %v317
        %v350 = vadd.f32 %v286, %v318
        %v351 = vadd.f32 %v287, %v319
        %v352 = vadd.f32 %v288, %v320
        %v353 = vadd.f32 %v289, %v321
        %v354 = vadd.f32 %v290, %v322
        %v355 = vadd.f32 %v291, %v323
        %v356 = vadd.f32 %v292, %v324
        %v357 = vadd.f32 %v293, %v325
        %v358 = vadd.f32 %v294, %v326
        %v359 = vadd.f32 %v295, %v327
        %v360 = vadd.f32 %v296, %v328
        %v361 = vadd.f32 %v297, %v329
        %v362 = vadd.f32 %v298, %v330
        %v363 = vadd.f32 %v299, %v331
        %v364 = vadd.f32 %v300, %v332
        %v365 = vadd.f32 %v301, %v333
        %v366 = vadd.f32 %v302, %v334
        %v367 = vadd.f32 %v303, %v335
        %v368 = vadd.f32 %v304, %v336
        %v369 = vadd.f32 %v305, %v337
        %v370 = vadd.f32 %v306, %v338
        %v371 = vadd.f32 %v307, %v339
        %v372 = vadd.f32 %v308, %v340
        %v373 = vadd.f32 %v309, %v341
        %v374 = vadd.f32 %v310, %v342
        %v375 = vadd.f32 %v311, %v343
        %376 = vst [vmem:[#allocation2] sm:$0xff] %v344
        %377 = vst [vmem:[#allocation2 + $0x8] sm:$0xff] %v345
        %378 = vst [vmem:[#allocation2 + $0x10] sm:$0xff] %v346
        %379 = vst [vmem:[#allocation2 + $0x18] sm:$0xff] %v347
        %380 = vst [vmem:[#allocation2 + $0x20] sm:$0xff] %v348
        %381 = vst [vmem:[#allocation2 + $0x28] sm:$0xff] %v349
        %382 = vst [vmem:[#allocation2 + $0x30] sm:$0xff] %v350
        %383 = vst [vmem:[#allocation2 + $0x38] sm:$0xff] %v351
        %384 = vst [vmem:[#allocation2 + $0x40] sm:$0xff] %v352
        %385 = vst [vmem:[#allocation2 + $0x48] sm:$0xff] %v353
        %386 = vst [vmem:[#allocation2 + $0x50] sm:$0xff] %v354
        %387 = vst [vmem:[#allocation2 + $0x58] sm:$0xff] %v355
        %388 = vst [vmem:[#allocation2 + $0x60] sm:$0xff] %v356
        %389 = vst [vmem:[#allocation2 + $0x68] sm:$0xff] %v357
        %390 = vst [vmem:[#allocation2 + $0x70] sm:$0xff] %v358
        %391 = vst [vmem:[#allocation2 + $0x78] sm:$0xff] %v359
        %392 = vst [vmem:[#allocation2 + $0x80] sm:$0xff] %v360
        %393 = vst [vmem:[#allocation2 + $0x88] sm:$0xff] %v361
        %394 = vst [vmem:[#allocation2 + $0x90] sm:$0xff] %v362
        %395 = vst [vmem:[#allocation2 + $0x98] sm:$0xff] %v363
        %396 = vst [vmem:[#allocation2 + $0xa0] sm:$0xff] %v364
        %397 = vst [vmem:[#allocation2 + $0xa8] sm:$0xff] %v365
        %398 = vst [vmem:[#allocation2 + $0xb0] sm:$0xff] %v366
        %399 = vst [vmem:[#allocation2 + $0xb8] sm:$0xff] %v367
        %400 = vst [vmem:[#allocation2 + $0xc0] sm:$0xff] %v368
        %401 = vst [vmem:[#allocation2 + $0xc8] sm:$0xff] %v369
        %402 = vst [vmem:[#allocation2 + $0xd0] sm:$0xff] %v370
        %403 = vst [vmem:[#allocation2 + $0xd8] sm:$0xff] %v371
        %404 = vst [vmem:[#allocation2 + $0xe0] sm:$0xff] %v372
        %405 = vst [vmem:[#allocation2 + $0xe8] sm:$0xff] %v373
        %406 = vst [vmem:[#allocation2 + $0xf0] sm:$0xff] %v374
        %407 = vst [vmem:[#allocation2 + $0xf8] sm:$0xff] %v375
        %p408 = scmp.eq.s32.totalorder %s24, 1
        // Predicated region
        $region41: #{tpu_custom_call.1} parent=31 // pred_check
          %p409 = pneg %p408
        $region42: #{tpu_custom_call.1} parent=31 // pred_check_branch
          %411 = sbr.rel (%p409) target = $region44
        $region43: #{tpu_custom_call.1} parent=31 // pred_region
          %v412 = vld [vmem:[#allocation2] sm:$0xff]
          %v413 = vld [vmem:[#allocation2 + $0x8] sm:$0xff]
          %v414 = vld [vmem:[#allocation2 + $0x10] sm:$0xff]
          %v415 = vld [vmem:[#allocation2 + $0x18] sm:$0xff]
          %v416 = vld [vmem:[#allocation2 + $0x20] sm:$0xff]
          %v417 = vld [vmem:[#allocation2 + $0x28] sm:$0xff]
          %v418 = vld [vmem:[#allocation2 + $0x30] sm:$0xff]
          %v419 = vld [vmem:[#allocation2 + $0x38] sm:$0xff]
          %v420 = vld [vmem:[#allocation2 + $0x40] sm:$0xff]
          %v421 = vld [vmem:[#allocation2 + $0x48] sm:$0xff]
          %v422 = vld [vmem:[#allocation2 + $0x50] sm:$0xff]
          %v423 = vld [vmem:[#allocation2 + $0x58] sm:$0xff]
          %v424 = vld [vmem:[#allocation2 + $0x60] sm:$0xff]
          %v425 = vld [vmem:[#allocation2 + $0x68] sm:$0xff]
          %v426 = vld [vmem:[#allocation2 + $0x70] sm:$0xff]
          %v427 = vld [vmem:[#allocation2 + $0x78] sm:$0xff]
          %v428 = vld [vmem:[#allocation2 + $0x80] sm:$0xff]
          %v429 = vld [vmem:[#allocation2 + $0x88] sm:$0xff]
          %v430 = vld [vmem:[#allocation2 + $0x90] sm:$0xff]
          %v431 = vld [vmem:[#allocation2 + $0x98] sm:$0xff]
          %v432 = vld [vmem:[#allocation2 + $0xa0] sm:$0xff]
          %v433 = vld [vmem:[#allocation2 + $0xa8] sm:$0xff]
          %v434 = vld [vmem:[#allocation2 + $0xb0] sm:$0xff]
          %v435 = vld [vmem:[#allocation2 + $0xb8] sm:$0xff]
          %v436 = vld [vmem:[#allocation2 + $0xc0] sm:$0xff]
          %v437 = vld [vmem:[#allocation2 + $0xc8] sm:$0xff]
          %v438 = vld [vmem:[#allocation2 + $0xd0] sm:$0xff]
          %v439 = vld [vmem:[#allocation2 + $0xd8] sm:$0xff]
          %v440 = vld [vmem:[#allocation2 + $0xe0] sm:$0xff]
          %v441 = vld [vmem:[#allocation2 + $0xe8] sm:$0xff]
          %v442 = vld [vmem:[#allocation2 + $0xf0] sm:$0xff]
          %v443 = vld [vmem:[#allocation2 + $0xf8] sm:$0xff]
          %444 = vadd.xlane.f32.xlu0 %v412
          %v445 = vpop.xlane.xlu0 %444
          %446 = vadd.xlane.f32.xlu0 %v413
          %v447 = vpop.xlane.xlu0 %446
          %448 = vadd.xlane.f32.xlu0 %v414
          %v449 = vpop.xlane.xlu0 %448
          %450 = vadd.xlane.f32.xlu0 %v415
          %v451 = vpop.xlane.xlu0 %450
          %452 = vadd.xlane.f32.xlu0 %v416
          %v453 = vpop.xlane.xlu0 %452
          %454 = vadd.xlane.f32.xlu0 %v417
          %v455 = vpop.xlane.xlu0 %454
          %456 = vadd.xlane.f32.xlu0 %v418
          %v457 = vpop.xlane.xlu0 %456
          %458 = vadd.xlane.f32.xlu0 %v419
          %v459 = vpop.xlane.xlu0 %458
          %460 = vadd.xlane.f32.xlu0 %v420
          %v461 = vpop.xlane.xlu0 %460
          %462 = vadd.xlane.f32.xlu0 %v421
          %v463 = vpop.xlane.xlu0 %462
          %464 = vadd.xlane.f32.xlu0 %v422
          %v465 = vpop.xlane.xlu0 %464
          %466 = vadd.xlane.f32.xlu0 %v423
          %v467 = vpop.xlane.xlu0 %466
          %468 = vadd.xlane.f32.xlu0 %v424
          %v469 = vpop.xlane.xlu0 %468
          %470 = vadd.xlane.f32.xlu0 %v425
          %v471 = vpop.xlane.xlu0 %470
          %472 = vadd.xlane.f32.xlu0 %v426
          %v473 = vpop.xlane.xlu0 %472
          %474 = vadd.xlane.f32.xlu0 %v427
          %v475 = vpop.xlane.xlu0 %474
          %476 = vadd.xlane.f32.xlu0 %v428
          %v477 = vpop.xlane.xlu0 %476
          %478 = vadd.xlane.f32.xlu0 %v429
          %v479 = vpop.xlane.xlu0 %478
          %480 = vadd.xlane.f32.xlu0 %v430
          %v481 = vpop.xlane.xlu0 %480
          %482 = vadd.xlane.f32.xlu0 %v431
          %v483 = vpop.xlane.xlu0 %482
          %484 = vadd.xlane.f32.xlu0 %v432
          %v485 = vpop.xlane.xlu0 %484
          %486 = vadd.xlane.f32.xlu0 %v433
          %v487 = vpop.xlane.xlu0 %486
          %488 = vadd.xlane.f32.xlu0 %v434
          %v489 = vpop.xlane.xlu0 %488
          %490 = vadd.xlane.f32.xlu0 %v435
          %v491 = vpop.xlane.xlu0 %490
          %492 = vadd.xlane.f32.xlu0 %v436
          %v493 = vpop.xlane.xlu0 %492
          %494 = vadd.xlane.f32.xlu0 %v437
          %v495 = vpop.xlane.xlu0 %494
          %496 = vadd.xlane.f32.xlu0 %v438
          %v497 = vpop.xlane.xlu0 %496
          %498 = vadd.xlane.f32.xlu0 %v439
          %v499 = vpop.xlane.xlu0 %498
          %500 = vadd.xlane.f32.xlu0 %v440
          %v501 = vpop.xlane.xlu0 %500
          %502 = vadd.xlane.f32.xlu0 %v441
          %v503 = vpop.xlane.xlu0 %502
          %504 = vadd.xlane.f32.xlu0 %v442
          %v505 = vpop.xlane.xlu0 %504
          %506 = vadd.xlane.f32.xlu0 %v443
          %v507 = vpop.xlane.xlu0 %506
          %v508 = vld [vmem:[%s1] sm:$0xff]
          %v509 = vld [vmem:[%s1 + $0x8] sm:$0xff]
          %v510 = vld [vmem:[%s1 + $0x10] sm:$0xff]
          %v511 = vld [vmem:[%s1 + $0x18] sm:$0xff]
          %v512 = vld [vmem:[%s2] sm:$0xf]
          %v513 = vlaneseq
          %v514 = vshrl.u32 %v513, 7
          %v515 = vsub.s32 0, %v514
          %v516 = vrot.slane %v512, %v515
          %v525 = vlaneseq
          %v526 = vand.u32 %v525, 127
          %v527 = vlaneseq
          %v528 = vshrl.u32 %v527, 7
          %v529 = vsub.s32 %v526, %v528
          %v530 = vrot.slane %v445, %v529
          %v531 = vlaneseq
          %v532 = vshrl.u32 %v531, 7
          %v533 = vsub.s32 %v526, %v532
          %v534 = vrot.slane %v453, %v533
          %v535 = vlaneseq
          %v536 = vshrl.u32 %v535, 7
          %v537 = vsub.s32 %v526, %v536
          %v538 = vrot.slane %v461, %v537
          %v539 = vlaneseq
          %v540 = vshrl.u32 %v539, 7
          %v541 = vsub.s32 %v526, %v540
          %v542 = vrot.slane %v469, %v541
          %v543 = vlaneseq
          %v544 = vshrl.u32 %v543, 7
          %v545 = vsub.s32 %v526, %v544
          %v546 = vrot.slane %v477, %v545
          %v547 = vlaneseq
          %v548 = vshrl.u32 %v547, 7
          %v549 = vsub.s32 %v526, %v548
          %v550 = vrot.slane %v485, %v549
          %v551 = vlaneseq
          %v552 = vshrl.u32 %v551, 7
          %v553 = vsub.s32 %v526, %v552
          %v554 = vrot.slane %v493, %v553
          %v555 = vlaneseq
          %v556 = vshrl.u32 %v555, 7
          %v557 = vsub.s32 %v526, %v556
          %v558 = vrot.slane %v501, %v557
          %vm559 = vcmask 1041409
          %v560 = vsel %vm559, %v534, %v530
          %vm561 = vcmask 1042434
          %v562 = vsel %vm561, %v538, %v560
          %vm563 = vcmask 1043459
          %v564 = vsel %vm563, %v542, %v562
          %vm565 = vcmask 1044484
          %v566 = vsel %vm565, %v546, %v564
          %vm567 = vcmask 1045509
          %v568 = vsel %vm567, %v550, %v566
          %vm569 = vcmask 1046534
          %v570 = vsel %vm569, %v554, %v568
          %vm571 = vcmask 1047559
          %v572 = vsel %vm571, %v558, %v570
          %vm573 = vcmask 64512
          %v574 = vsel %vm573, %v572, 0
          %576 = vmatprep.subr.mxu0 0.0
          %577 = vmatpush1.msra.mxu0 %v508
          %578 = vmatprep.subr.mxu0 0.0
          %579 = vmatpush1.msra.mxu0 0.0
          %580 = vmatprep.subr.mxu0 0.0
          %581 = vmatpush1.msra.mxu0 0.0
          %582 = vmatprep.subr.mxu0 0.0
          %583 = vmatpush1.msra.mxu0 0.0
          %584 = vmatprep.subr.mxu0 0.0
          %585 = vmatpush1.msra.mxu0 0.0
          %586 = vmatprep.subr.mxu0 0.0
          %587 = vmatpush1.msra.mxu0 0.0
          %588 = vmatprep.subr.mxu0 0.0
          %589 = vmatpush1.msra.mxu0 0.0
          %590 = vmatprep.subr.mxu0 0.0
          %591 = vmatpush1.msra.mxu0 0.0
          %592 = vmatprep.subr.mxu0 0.0
          %593 = vmatpush1.msra.mxu0 0.0
          %594 = vmatprep.subr.mxu0 0.0
          %595 = vmatpush1.msra.mxu0 0.0
          %596 = vmatprep.subr.mxu0 0.0
          %597 = vmatpush1.msra.mxu0 0.0
          %598 = vmatprep.subr.mxu0 0.0
          %599 = vmatpush1.msra.mxu0 0.0
          %600 = vmatprep.subr.mxu0 0.0
          %601 = vmatpush1.msra.mxu0 0.0
          %602 = vmatprep.subr.mxu0 0.0
          %603 = vmatpush1.msra.mxu0 0.0
          %604 = vmatprep.subr.mxu0 0.0
          %605 = vmatpush1.msra.mxu0 0.0
          %606 = vmatprep.subr.mxu0 0.0
          %607 = vmatpush1.msra.mxu0 0.0
          %608 = vmatprep.subr.mxu0 0.0
          %609 = vmatpush1.msra.mxu0 0.0
          %610 = vmatprep.subr.mxu0 0.0
          %611 = vmatpush1.msra.mxu0 0.0
          %612 = vmatprep.subr.mxu0 0.0
          %613 = vmatpush1.msra.mxu0 0.0
          %614 = vmatprep.subr.mxu0 0.0
          %615 = vmatpush1.msra.mxu0 0.0
          %616 = vmatprep.subr.mxu0 0.0
          %617 = vmatpush1.msra.mxu0 0.0
          %618 = vmatprep.subr.mxu0 0.0
          %619 = vmatpush1.msra.mxu0 0.0
          %620 = vmatprep.subr.mxu0 0.0
          %621 = vmatpush1.msra.mxu0 0.0
          %622 = vmatprep.subr.mxu0 0.0
          %623 = vmatpush1.msra.mxu0 0.0
          %624 = vmatprep.subr.mxu0 0.0
          %625 = vmatpush1.msra.mxu0 0.0
          %626 = vmatprep.subr.mxu0 0.0
          %627 = vmatpush1.msra.mxu0 0.0
          %628 = vmatprep.subr.mxu0 0.0
          %629 = vmatpush1.msra.mxu0 0.0
          %630 = vmatprep.subr.mxu0 0.0
          %631 = vmatpush1.msra.mxu0 0.0
          %632 = vmatprep.subr.mxu0 0.0
          %633 = vmatpush1.msra.mxu0 0.0
          %634 = vmatprep.subr.mxu0 0.0
          %635 = vmatpush1.msra.mxu0 0.0
          %636 = vmatprep.subr.mxu0 0.0
          %637 = vmatpush1.msra.mxu0 0.0
          %638 = vmatprep.subr.mxu0 0.0
          %639 = vmatpush1.msra.mxu0 0.0
          %640 = vmatprep.mubr.f32.mxu0 0.0
          %641 = vmatmul.mubr.f32.gmra.mrb[0].mxu0 %v574
          %v642 = vpop.f32.mrb[0].mxu0
          %v643 = vadd.f32 %v516, %v642
          %v644 = vpop.f32.mrb[0].mxu0
          %645 = vdwg.mxu0
          %v646 = vlaneseq
          %v647 = vshrl.u32 %v646, 7
          %v648 = vsub.s32 1, %v647
          %v649 = vrot.slane %v512, %v648
          %v658 = vlaneseq
          %v659 = vshrl.u32 %v658, 7
          %v660 = vsub.s32 %v526, %v659
          %v661 = vrot.slane %v447, %v660
          %v662 = vlaneseq
          %v663 = vshrl.u32 %v662, 7
          %v664 = vsub.s32 %v526, %v663
          %v665 = vrot.slane %v455, %v664
          %v666 = vlaneseq
          %v667 = vshrl.u32 %v666, 7
          %v668 = vsub.s32 %v526, %v667
          %v669 = vrot.slane %v463, %v668
          %v670 = vlaneseq
          %v671 = vshrl.u32 %v670, 7
          %v672 = vsub.s32 %v526, %v671
          %v673 = vrot.slane %v471, %v672
          %v674 = vlaneseq
          %v675 = vshrl.u32 %v674, 7
          %v676 = vsub.s32 %v526, %v675
          %v677 = vrot.slane %v479, %v676
          %v678 = vlaneseq
          %v679 = vshrl.u32 %v678, 7
          %v680 = vsub.s32 %v526, %v679
          %v681 = vrot.slane %v487, %v680
          %v682 = vlaneseq
          %v683 = vshrl.u32 %v682, 7
          %v684 = vsub.s32 %v526, %v683
          %v685 = vrot.slane %v495, %v684
          %v686 = vlaneseq
          %v687 = vshrl.u32 %v686, 7
          %v688 = vsub.s32 %v526, %v687
          %v689 = vrot.slane %v503, %v688
          %v690 = vsel %vm559, %v665, %v661
          %v691 = vsel %vm561, %v669, %v690
          %v692 = vsel %vm563, %v673, %v691
          %v693 = vsel %vm565, %v677, %v692
          %v694 = vsel %vm567, %v681, %v693
          %v695 = vsel %vm569, %v685, %v694
          %v696 = vsel %vm571, %v689, %v695
          %v697 = vsel %vm573, %v696, 0
          %699 = vmatprep.subr.mxu0 0.0
          %700 = vmatpush1.msra.mxu0 %v509
          %701 = vmatprep.subr.mxu0 0.0
          %702 = vmatpush1.msra.mxu0 0.0
          %703 = vmatprep.subr.mxu0 0.0
          %704 = vmatpush1.msra.mxu0 0.0
          %705 = vmatprep.subr.mxu0 0.0
          %706 = vmatpush1.msra.mxu0 0.0
          %707 = vmatprep.subr.mxu0 0.0
          %708 = vmatpush1.msra.mxu0 0.0
          %709 = vmatprep.subr.mxu0 0.0
          %710 = vmatpush1.msra.mxu0 0.0
          %711 = vmatprep.subr.mxu0 0.0
          %712 = vmatpush1.msra.mxu0 0.0
          %713 = vmatprep.subr.mxu0 0.0
          %714 = vmatpush1.msra.mxu0 0.0
          %715 = vmatprep.subr.mxu0 0.0
          %716 = vmatpush1.msra.mxu0 0.0
          %717 = vmatprep.subr.mxu0 0.0
          %718 = vmatpush1.msra.mxu0 0.0
          %719 = vmatprep.subr.mxu0 0.0
          %720 = vmatpush1.msra.mxu0 0.0
          %721 = vmatprep.subr.mxu0 0.0
          %722 = vmatpush1.msra.mxu0 0.0
          %723 = vmatprep.subr.mxu0 0.0
          %724 = vmatpush1.msra.mxu0 0.0
          %725 = vmatprep.subr.mxu0 0.0
          %726 = vmatpush1.msra.mxu0 0.0
          %727 = vmatprep.subr.mxu0 0.0
          %728 = vmatpush1.msra.mxu0 0.0
          %729 = vmatprep.subr.mxu0 0.0
          %730 = vmatpush1.msra.mxu0 0.0
          %731 = vmatprep.subr.mxu0 0.0
          %732 = vmatpush1.msra.mxu0 0.0
          %733 = vmatprep.subr.mxu0 0.0
          %734 = vmatpush1.msra.mxu0 0.0
          %735 = vmatprep.subr.mxu0 0.0
          %736 = vmatpush1.msra.mxu0 0.0
          %737 = vmatprep.subr.mxu0 0.0
          %738 = vmatpush1.msra.mxu0 0.0
          %739 = vmatprep.subr.mxu0 0.0
          %740 = vmatpush1.msra.mxu0 0.0
          %741 = vmatprep.subr.mxu0 0.0
          %742 = vmatpush1.msra.mxu0 0.0
          %743 = vmatprep.subr.mxu0 0.0
          %744 = vmatpush1.msra.mxu0 0.0
          %745 = vmatprep.subr.mxu0 0.0
          %746 = vmatpush1.msra.mxu0 0.0
          %747 = vmatprep.subr.mxu0 0.0
          %748 = vmatpush1.msra.mxu0 0.0
          %749 = vmatprep.subr.mxu0 0.0
          %750 = vmatpush1.msra.mxu0 0.0
          %751 = vmatprep.subr.mxu0 0.0
          %752 = vmatpush1.msra.mxu0 0.0
          %753 = vmatprep.subr.mxu0 0.0
          %754 = vmatpush1.msra.mxu0 0.0
          %755 = vmatprep.subr.mxu0 0.0
          %756 = vmatpush1.msra.mxu0 0.0
          %757 = vmatprep.subr.mxu0 0.0
          %758 = vmatpush1.msra.mxu0 0.0
          %759 = vmatprep.subr.mxu0 0.0
          %760 = vmatpush1.msra.mxu0 0.0
          %761 = vmatprep.subr.mxu0 0.0
          %762 = vmatpush1.msra.mxu0 0.0
          %763 = vmatprep.mubr.f32.mxu0 0.0
          %764 = vmatmul.mubr.f32.gmra.mrb[0].mxu0 %v697
          %v765 = vpop.f32.mrb[0].mxu0
          %v766 = vadd.f32 %v649, %v765
          %v767 = vpop.f32.mrb[0].mxu0
          %768 = vdwg.mxu0
          %v769 = vlaneseq
          %v770 = vshrl.u32 %v769, 7
          %v771 = vsub.s32 2, %v770
          %v772 = vrot.slane %v512, %v771
          %v781 = vlaneseq
          %v782 = vshrl.u32 %v781, 7
          %v783 = vsub.s32 %v526, %v782
          %v784 = vrot.slane %v449, %v783
          %v785 = vlaneseq
          %v786 = vshrl.u32 %v785, 7
          %v787 = vsub.s32 %v526, %v786
          %v788 = vrot.slane %v457, %v787
          %v789 = vlaneseq
          %v790 = vshrl.u32 %v789, 7
          %v791 = vsub.s32 %v526, %v790
          %v792 = vrot.slane %v465, %v791
          %v793 = vlaneseq
          %v794 = vshrl.u32 %v793, 7
          %v795 = vsub.s32 %v526, %v794
          %v796 = vrot.slane %v473, %v795
          %v797 = vlaneseq
          %v798 = vshrl.u32 %v797, 7
          %v799 = vsub.s32 %v526, %v798
          %v800 = vrot.slane %v481, %v799
          %v801 = vlaneseq
          %v802 = vshrl.u32 %v801, 7
          %v803 = vsub.s32 %v526, %v802
          %v804 = vrot.slane %v489, %v803
          %v805 = vlaneseq
          %v806 = vshrl.u32 %v805, 7
          %v807 = vsub.s32 %v526, %v806
          %v808 = vrot.slane %v497, %v807
          %v809 = vlaneseq
          %v810 = vshrl.u32 %v809, 7
          %v811 = vsub.s32 %v526, %v810
          %v812 = vrot.slane %v505, %v811
          %v813 = vsel %vm559, %v788, %v784
          %v814 = vsel %vm561, %v792, %v813
          %v815 = vsel %vm563, %v796, %v814
          %v816 = vsel %vm565, %v800, %v815
          %v817 = vsel %vm567, %v804, %v816
          %v818 = vsel %vm569, %v808, %v817
          %v819 = vsel %vm571, %v812, %v818
          %v820 = vsel %vm573, %v819, 0
          %822 = vmatprep.subr.mxu0 0.0
          %823 = vmatpush1.msra.mxu0 %v510
          %824 = vmatprep.subr.mxu0 0.0
          %825 = vmatpush1.msra.mxu0 0.0
          %826 = vmatprep.subr.mxu0 0.0
          %827 = vmatpush1.msra.mxu0 0.0
          %828 = vmatprep.subr.mxu0 0.0
          %829 = vmatpush1.msra.mxu0 0.0
          %830 = vmatprep.subr.mxu0 0.0
          %831 = vmatpush1.msra.mxu0 0.0
          %832 = vmatprep.subr.mxu0 0.0
          %833 = vmatpush1.msra.mxu0 0.0
          %834 = vmatprep.subr.mxu0 0.0
          %835 = vmatpush1.msra.mxu0 0.0
          %836 = vmatprep.subr.mxu0 0.0
          %837 = vmatpush1.msra.mxu0 0.0
          %838 = vmatprep.subr.mxu0 0.0
          %839 = vmatpush1.msra.mxu0 0.0
          %840 = vmatprep.subr.mxu0 0.0
          %841 = vmatpush1.msra.mxu0 0.0
          %842 = vmatprep.subr.mxu0 0.0
          %843 = vmatpush1.msra.mxu0 0.0
          %844 = vmatprep.subr.mxu0 0.0
          %845 = vmatpush1.msra.mxu0 0.0
          %846 = vmatprep.subr.mxu0 0.0
          %847 = vmatpush1.msra.mxu0 0.0
          %848 = vmatprep.subr.mxu0 0.0
          %849 = vmatpush1.msra.mxu0 0.0
          %850 = vmatprep.subr.mxu0 0.0
          %851 = vmatpush1.msra.mxu0 0.0
          %852 = vmatprep.subr.mxu0 0.0
          %853 = vmatpush1.msra.mxu0 0.0
          %854 = vmatprep.subr.mxu0 0.0
          %855 = vmatpush1.msra.mxu0 0.0
          %856 = vmatprep.subr.mxu0 0.0
          %857 = vmatpush1.msra.mxu0 0.0
          %858 = vmatprep.subr.mxu0 0.0
          %859 = vmatpush1.msra.mxu0 0.0
          %860 = vmatprep.subr.mxu0 0.0
          %861 = vmatpush1.msra.mxu0 0.0
          %862 = vmatprep.subr.mxu0 0.0
          %863 = vmatpush1.msra.mxu0 0.0
          %864 = vmatprep.subr.mxu0 0.0
          %865 = vmatpush1.msra.mxu0 0.0
          %866 = vmatprep.subr.mxu0 0.0
          %867 = vmatpush1.msra.mxu0 0.0
          %868 = vmatprep.subr.mxu0 0.0
          %869 = vmatpush1.msra.mxu0 0.0
          %870 = vmatprep.subr.mxu0 0.0
          %871 = vmatpush1.msra.mxu0 0.0
          %872 = vmatprep.subr.mxu0 0.0
          %873 = vmatpush1.msra.mxu0 0.0
          %874 = vmatprep.subr.mxu0 0.0
          %875 = vmatpush1.msra.mxu0 0.0
          %876 = vmatprep.subr.mxu0 0.0
          %877 = vmatpush1.msra.mxu0 0.0
          %878 = vmatprep.subr.mxu0 0.0
          %879 = vmatpush1.msra.mxu0 0.0
          %880 = vmatprep.subr.mxu0 0.0
          %881 = vmatpush1.msra.mxu0 0.0
          %882 = vmatprep.subr.mxu0 0.0
          %883 = vmatpush1.msra.mxu0 0.0
          %884 = vmatprep.subr.mxu0 0.0
          %885 = vmatpush1.msra.mxu0 0.0
          %886 = vmatprep.mubr.f32.mxu0 0.0
          %887 = vmatmul.mubr.f32.gmra.mrb[0].mxu0 %v820
          %v888 = vpop.f32.mrb[0].mxu0
          %v889 = vadd.f32 %v772, %v888
          %v890 = vpop.f32.mrb[0].mxu0
          %891 = vdwg.mxu0
          %v892 = vlaneseq
          %v893 = vshrl.u32 %v892, 7
          %v894 = vsub.s32 3, %v893
          %v895 = vrot.slane %v512, %v894
          %v904 = vlaneseq
          %v905 = vshrl.u32 %v904, 7
          %v906 = vsub.s32 %v526, %v905
          %v907 = vrot.slane %v451, %v906
          %v908 = vlaneseq
          %v909 = vshrl.u32 %v908, 7
          %v910 = vsub.s32 %v526, %v909
          %v911 = vrot.slane %v459, %v910
          %v912 = vlaneseq
          %v913 = vshrl.u32 %v912, 7
          %v914 = vsub.s32 %v526, %v913
          %v915 = vrot.slane %v467, %v914
          %v916 = vlaneseq
          %v917 = vshrl.u32 %v916, 7
          %v918 = vsub.s32 %v526, %v917
          %v919 = vrot.slane %v475, %v918
          %v920 = vlaneseq
          %v921 = vshrl.u32 %v920, 7
          %v922 = vsub.s32 %v526, %v921
          %v923 = vrot.slane %v483, %v922
          %v924 = vlaneseq
          %v925 = vshrl.u32 %v924, 7
          %v926 = vsub.s32 %v526, %v925
          %v927 = vrot.slane %v491, %v926
          %v928 = vlaneseq
          %v929 = vshrl.u32 %v928, 7
          %v930 = vsub.s32 %v526, %v929
          %v931 = vrot.slane %v499, %v930
          %v932 = vlaneseq
          %v933 = vshrl.u32 %v932, 7
          %v934 = vsub.s32 %v526, %v933
          %v935 = vrot.slane %v507, %v934
          %v936 = vsel %vm559, %v911, %v907
          %v937 = vsel %vm561, %v915, %v936
          %v938 = vsel %vm563, %v919, %v937
          %v939 = vsel %vm565, %v923, %v938
          %v940 = vsel %vm567, %v927, %v939
          %v941 = vsel %vm569, %v931, %v940
          %v942 = vsel %vm571, %v935, %v941
          %v943 = vsel %vm573, %v942, 0
          %945 = vmatprep.subr.mxu0 0.0
          %946 = vmatpush1.msra.mxu0 %v511
          %947 = vmatprep.subr.mxu0 0.0
          %948 = vmatpush1.msra.mxu0 0.0
          %949 = vmatprep.subr.mxu0 0.0
          %950 = vmatpush1.msra.mxu0 0.0
          %951 = vmatprep.subr.mxu0 0.0
          %952 = vmatpush1.msra.mxu0 0.0
          %953 = vmatprep.subr.mxu0 0.0
          %954 = vmatpush1.msra.mxu0 0.0
          %955 = vmatprep.subr.mxu0 0.0
          %956 = vmatpush1.msra.mxu0 0.0
          %957 = vmatprep.subr.mxu0 0.0
          %958 = vmatpush1.msra.mxu0 0.0
          %959 = vmatprep.subr.mxu0 0.0
          %960 = vmatpush1.msra.mxu0 0.0
          %961 = vmatprep.subr.mxu0 0.0
          %962 = vmatpush1.msra.mxu0 0.0
          %963 = vmatprep.subr.mxu0 0.0
          %964 = vmatpush1.msra.mxu0 0.0
          %965 = vmatprep.subr.mxu0 0.0
          %966 = vmatpush1.msra.mxu0 0.0
          %967 = vmatprep.subr.mxu0 0.0
          %968 = vmatpush1.msra.mxu0 0.0
          %969 = vmatprep.subr.mxu0 0.0
          %970 = vmatpush1.msra.mxu0 0.0
          %971 = vmatprep.subr.mxu0 0.0
          %972 = vmatpush1.msra.mxu0 0.0
          %973 = vmatprep.subr.mxu0 0.0
          %974 = vmatpush1.msra.mxu0 0.0
          %975 = vmatprep.subr.mxu0 0.0
          %976 = vmatpush1.msra.mxu0 0.0
          %977 = vmatprep.subr.mxu0 0.0
          %978 = vmatpush1.msra.mxu0 0.0
          %979 = vmatprep.subr.mxu0 0.0
          %980 = vmatpush1.msra.mxu0 0.0
          %981 = vmatprep.subr.mxu0 0.0
          %982 = vmatpush1.msra.mxu0 0.0
          %983 = vmatprep.subr.mxu0 0.0
          %984 = vmatpush1.msra.mxu0 0.0
          %985 = vmatprep.subr.mxu0 0.0
          %986 = vmatpush1.msra.mxu0 0.0
          %987 = vmatprep.subr.mxu0 0.0
          %988 = vmatpush1.msra.mxu0 0.0
          %989 = vmatprep.subr.mxu0 0.0
          %990 = vmatpush1.msra.mxu0 0.0
          %991 = vmatprep.subr.mxu0 0.0
          %992 = vmatpush1.msra.mxu0 0.0
          %993 = vmatprep.subr.mxu0 0.0
          %994 = vmatpush1.msra.mxu0 0.0
          %995 = vmatprep.subr.mxu0 0.0
          %996 = vmatpush1.msra.mxu0 0.0
          %997 = vmatprep.subr.mxu0 0.0
          %998 = vmatpush1.msra.mxu0 0.0
          %999 = vmatprep.subr.mxu0 0.0
          %1000 = vmatpush1.msra.mxu0 0.0
          %1001 = vmatprep.subr.mxu0 0.0
          %1002 = vmatpush1.msra.mxu0 0.0
          %1003 = vmatprep.subr.mxu0 0.0
          %1004 = vmatpush1.msra.mxu0 0.0
          %1005 = vmatprep.subr.mxu0 0.0
          %1006 = vmatpush1.msra.mxu0 0.0
          %1007 = vmatprep.subr.mxu0 0.0
          %1008 = vmatpush1.msra.mxu0 0.0
          %1009 = vmatprep.mubr.f32.mxu0 0.0
          %1010 = vmatmul.mubr.f32.gmra.mrb[0].mxu0 %v943
          %v1011 = vpop.f32.mrb[0].mxu0
          %v1012 = vadd.f32 %v895, %v1011
          %v1013 = vpop.f32.mrb[0].mxu0
          %1014 = vdwg.mxu0
          %v1015 = vadd.f32 %v643, %v766
          %v1016 = vadd.f32 %v1015, %v889
          %v1017 = vadd.f32 %v1016, %v1012
          %vm1018 = vcmask 15360
          %1019 = vst.msk [vmem:[%s243] sm:$0xff] %vm1018, %v1017
          %v1020 = vsel %vm1018, %v643, -inf
          %1021 = vmax.xlane.f32.xlu0 %v1020
          %v1022 = vpop.xlane.xlu0 %1021
          %v1023 = vsub.f32 %v643, %v1022
          %v1024 = vmul.f32 %v1023, 1.442695
          %v1025 = vpow.pop %v1024
          %v1026 = vsel %vm1018, %v1025, 0.0
          %1027 = vadd.xlane.f32.xlu0 %v1026
          %v1028 = vpop.xlane.xlu0 %1027
          %v1029 = vrcp.pop %v1028
          %v1030 = vmul.f32 %v1025, %v1029
          %1032 = vset.pattern.permute.xlu0 0
          %1033 = vperm.xlu0 %1032, %v1030
          %v1034 = vpop.permute.xlu0 %1033
          %v1036 = vsub.f32 %v1030, %v1034
          %v1037 = vand.u32 2147483647, %v1036
          %v1038 = vsel %vm1018, %v1037, 0.0
          %1039 = vadd.xlane.f32.xlu0 %v1038
          %v1040 = vpop.xlane.xlu0 %1039
          %v1041 = vsel %vm1018, %v766, -inf
          %1042 = vmax.xlane.f32.xlu0 %v1041
          %v1043 = vpop.xlane.xlu0 %1042
          %v1044 = vsub.f32 %v766, %v1043
          %v1045 = vmul.f32 %v1044, 1.442695
          %v1046 = vpow.pop %v1045
          %v1047 = vsel %vm1018, %v1046, 0.0
          %1048 = vadd.xlane.f32.xlu0 %v1047
          %v1049 = vpop.xlane.xlu0 %1048
          %v1050 = vrcp.pop %v1049
          %v1051 = vmul.f32 %v1046, %v1050
          %1053 = vset.pattern.permute.xlu0 0
          %1054 = vperm.xlu0 %1053, %v1051
          %v1055 = vpop.permute.xlu0 %1054
          %v1057 = vsub.f32 %v1051, %v1055
          %v1058 = vand.u32 2147483647, %v1057
          %v1059 = vsel %vm1018, %v1058, 0.0
          %1060 = vadd.xlane.f32.xlu0 %v1059
          %v1061 = vpop.xlane.xlu0 %1060
          %v1062 = vsel %vm1018, %v889, -inf
          %1063 = vmax.xlane.f32.xlu0 %v1062
          %v1064 = vpop.xlane.xlu0 %1063
          %v1065 = vsub.f32 %v889, %v1064
          %v1066 = vmul.f32 %v1065, 1.442695
          %v1067 = vpow.pop %v1066
          %v1068 = vsel %vm1018, %v1067, 0.0
          %1069 = vadd.xlane.f32.xlu0 %v1068
          %v1070 = vpop.xlane.xlu0 %1069
          %v1071 = vrcp.pop %v1070
          %v1072 = vmul.f32 %v1067, %v1071
          %1074 = vset.pattern.permute.xlu0 0
          %1075 = vperm.xlu0 %1074, %v1072
          %v1076 = vpop.permute.xlu0 %1075
          %v1078 = vsub.f32 %v1072, %v1076
          %v1079 = vand.u32 2147483647, %v1078
          %v1080 = vsel %vm1018, %v1079, 0.0
          %1081 = vadd.xlane.f32.xlu0 %v1080
          %v1082 = vpop.xlane.xlu0 %1081
          %v1083 = vsel %vm1018, %v1012, -inf
          %1084 = vmax.xlane.f32.xlu0 %v1083
          %v1085 = vpop.xlane.xlu0 %1084
          %v1086 = vsub.f32 %v1012, %v1085
          %v1087 = vmul.f32 %v1086, 1.442695
          %v1088 = vpow.pop %v1087
          %v1089 = vsel %vm1018, %v1088, 0.0
          %1090 = vadd.xlane.f32.xlu0 %v1089
          %v1091 = vpop.xlane.xlu0 %1090
          %v1092 = vrcp.pop %v1091
          %v1093 = vmul.f32 %v1088, %v1092
          %1095 = vset.pattern.permute.xlu0 0
          %1096 = vperm.xlu0 %1095, %v1093
          %v1097 = vpop.permute.xlu0 %1096
          %v1099 = vsub.f32 %v1093, %v1097
          %v1100 = vand.u32 2147483647, %v1099
          %v1101 = vsel %vm1018, %v1100, 0.0
          %1102 = vadd.xlane.f32.xlu0 %v1101
          %v1103 = vpop.xlane.xlu0 %1102
          %v1104 = vmax.f32 %v1040, %v1061
          %v1105 = vmax.f32 %v1104, %v1082
          %v1106 = vmax.f32 %v1105, %v1103
          %v1107 = vsub.f32 %v1040, %v1106
          %v1108 = vmul.f32 %v1107, 1.442695
          %v1109 = vpow.pop %v1108
          %v1110 = vsub.f32 %v1061, %v1106
          %v1111 = vmul.f32 %v1110, 1.442695
          %v1112 = vpow.pop %v1111
          %v1113 = vsub.f32 %v1082, %v1106
          %v1114 = vmul.f32 %v1113, 1.442695
          %v1115 = vpow.pop %v1114
          %v1116 = vsub.f32 %v1103, %v1106
          %v1117 = vmul.f32 %v1116, 1.442695
          %v1118 = vpow.pop %v1117
          %v1119 = vadd.f32 %v1109, %v1112
          %v1120 = vadd.f32 %v1119, %v1115
          %v1121 = vadd.f32 %v1120, %v1118
          %v1122 = vrcp.pop %v1121
          %v1123 = vmul.f32 1.0, %v1122
          %v1124 = vmul.f32 %v1109, %v1123
          %v1125 = vmul.f32 %v1112, %v1123
          %v1126 = vmul.f32 %v1115, %v1123
          %v1127 = vmul.f32 %v1118, %v1123
          %vm1128 = vcmask 7168
          %v1129 = vsel %vm1128, %v1124, %v1125
          %v1130 = vsel %vm1018, %v1129, %v1126
          %vm1131 = vcmask 23552
          %v1132 = vsel %vm1131, %v1130, %v1127
          %vm1133 = vcmask 31744
          %1134 = vst.msk [vmem:[%s239] sm:$0xff] %vm1133, %v1132
        $region44: #{tpu_custom_call.1} parent=31 // pred_fallthru
          _
        %p1135 = scmp.lt.s32.totalorder %s23, 1
        %s1136 = scalar_select %p1135, %s23, 1
        %s1137 = smul.addr %s1136, 8
        %s1138 = scalar_lea.vmem %s3, %s1137
        %p1139 = scmp.lt.s32.totalorder %s23, 1
        %s1140 = scalar_select %p1139, %s23, 1
        %s1141 = smul.addr %s1140, 8
        %s1142 = scalar_lea.vmem %s4, %s1141
        // Predicated region
        $region45: #{tpu_custom_call.1} parent=31 // pred_check
          %p1143 = pneg %p119
        $region46: #{tpu_custom_call.1} parent=31 // pred_check_branch
          %1145 = sbr.rel (%p1143) target = $region48
        $region47: #{tpu_custom_call.1} parent=31 // pred_region
          _
        $region48: #{tpu_custom_call.1} parent=31 // pred_fallthru
          _
        // Predicated region
        $region49: #{tpu_custom_call.1} parent=31 // pred_check
          %p1146 = pneg %p145
        $region50: #{tpu_custom_call.1} parent=31 // pred_check_branch
          %1148 = sbr.rel (%p1146) target = $region52
        $region51: #{tpu_custom_call.1} parent=31 // pred_region
          _
        $region52: #{tpu_custom_call.1} parent=31 // pred_fallthru
          _
      $region32: #{tpu_custom_call.1} parent=5 // pred_fallthru
        _
      %p1149 = scmp.le.s32.totalorder 2, %s14
      // Predicated region
      $region53: #{tpu_custom_call.1} parent=5 // pred_check
        %p1150 = pneg %p1149
      $region54: #{tpu_custom_call.1} parent=5 // pred_check_branch
        %1152 = sbr.rel (%p1150) target = $region56
      $region55: #{tpu_custom_call.1} parent=5 // pred_region
        %s1153 = ssub.s32 %s14, 2
        // Predicated region
        $region57: #{tpu_custom_call.1} parent=55 // pred_check
          %p1154 = pneg %p125
        $region58: #{tpu_custom_call.1} parent=55 // pred_check_branch
          %1156 = sbr.rel (%p1154) target = $region60
        $region59: #{tpu_custom_call.1} parent=55 // pred_region
          %p1157 = scmp.lt.s32.totalorder %s25, 1
          %s1158 = scalar_select %p1157, %s25, 1
          %s1159 = smul.addr %s1158, 8
          %s1160 = scalar_lea.vmem %s3, %s1159
        $region60: #{tpu_custom_call.1} parent=55 // pred_fallthru
          _
        // Predicated region
        $region61: #{tpu_custom_call.1} parent=55 // pred_check
          %p1161 = pneg %p151
        $region62: #{tpu_custom_call.1} parent=55 // pred_check_branch
          %1163 = sbr.rel (%p1161) target = $region64
        $region63: #{tpu_custom_call.1} parent=55 // pred_region
          %p1164 = scmp.lt.s32.totalorder %s25, 1
          %s1165 = scalar_select %p1164, %s25, 1
          %s1166 = smul.addr %s1165, 8
          %s1167 = scalar_lea.vmem %s4, %s1166
        $region64: #{tpu_custom_call.1} parent=55 // pred_fallthru
          _
      $region56: #{tpu_custom_call.1} parent=5 // pred_fallthru
        _
    $region6: #{tpu_custom_call.1} parent=1 // loop_footer
      %s18 = sadd.s32 1, %s14
    $region7: #{tpu_custom_call.1} parent=1 // loop_footer_branch
      %13 = sbr.rel target = $region3
    $region8: #{tpu_custom_call.1} parent=1 // loop_exit
      _
    %1168 = vsyncpa [#allocation4], 1
    %s1169 = scalar_lea.sflag [#allocation4], 1
    %1170 = vsyncpa %s1169, 1

</llo_original>
